<compile_context>
chip_gen: v7x
topology: tpu7x:2x2x1
jax: 0.10.0
libtpu: 0.0.40
codegen_flags: <defaults>
</compile_context>

<pallas_src>
import functools

import jax
import jax.numpy as jnp
from jax import lax
from jax.experimental import pallas as pl
from jax.experimental.pallas import tpu as pltpu


BN_EPS = 1e-5


def _round_up(n, m=128):
    return ((n + m - 1) // m) * m


def _encoder_kernel(
    x_ref, w1_ref, w2_ref, w3_ref, wh_ref, p_ref, noise_ref,
    out_ref,
    *, hp1, hp2, hp3, lp,
):
    """Whole Encoder forward in one kernel invocation (everything in VMEM).

    p_ref slab rows: 0=g1 1=be1 2=g2 3=be2 4=g3 5=be3 6=[bmu|pad|bcon|pad].
    All hidden widths hp1/hp2/hp3 and the head width 2*lp are multiples of 128,
    so every load/store/matmul below is full-lane (unmasked).
    Output slab columns: [z | mu | log_sigma], each lp=128 lanes wide.
    """

    def lin_bn_relu(h, w_ref, g, be):
        # Linear (bias dropped: redundant before train-mode BN) -> BN -> ReLU.
        y = jnp.dot(h, w_ref[...], preferred_element_type=jnp.float32)
        n_rows = y.shape[0]
        hd = y.shape[1]
        # Single cross-sublane reduce for both sum(y) and sum(y*y).
        stats = jnp.sum(jnp.concatenate([y, y * y], axis=1),
                        axis=0, keepdims=True)               # (1, 2*hd)
        inv_n = 1.0 / n_rows
        mean = stats[:, :hd] * inv_n                         # (1, hd)
        ex2 = stats[:, hd:] * inv_n                          # (1, hd)
        var = ex2 - mean * mean                              # biased variance
        scale = g * lax.rsqrt(var + BN_EPS)                  # (1, hd)
        shift = be - mean * scale                            # (1, hd)
        # Padded columns: w-col = 0, g = be = 0  =>  scale = shift = 0  =>  0.
        return jnp.maximum(y * scale + shift, 0.0)

    h = x_ref[...]
    h = lin_bn_relu(h, w1_ref, p_ref[0:1, :hp1], p_ref[1:2, :hp1])
    h = lin_bn_relu(h, w2_ref, p_ref[2:3, :hp2], p_ref[3:4, :hp2])
    h = lin_bn_relu(h, w3_ref, p_ref[4:5, :hp3], p_ref[5:6, :hp3])

    # Fused mu / log_sigma head: one matmul, one bias add.
    head = jnp.dot(h, wh_ref[...], preferred_element_type=jnp.float32)
    head = head + p_ref[6:7, : 2 * lp]
    mu = head[:, :lp]
    ls = head[:, lp:]

    z = mu + jnp.exp(ls * 0.5) * noise_ref[...]

    # Lane-dense (128-aligned) stores into one output slab.
    out_ref[:, 0:lp] = z
    out_ref[:, lp:2 * lp] = mu
    out_ref[:, 2 * lp:3 * lp] = ls
    # NOTE: z lanes [latent, lp) carry exp(0)*noise (nonzero) and mu/ls lanes
    # [latent, lp) are 0 — the wrapper always slices to :latent.


def prepare_params(params, latent_pad=128):
    """One-time parameter preprocessing (hoisted out of the per-call path).

    - Transposes all weights to (in, out) layout.
    - Zero-pads hidden output widths to multiples of 128 (weights AND
      gamma/beta), so the kernel only does full-lane work.
    - Fuses the mu/con head weights into one (hp3, 2*latent_pad) matrix.
    - Packs every small vector into one (8, W) f32 slab.
    - Drops linear biases b1..b3: a per-column bias before TRAINING-mode
      BatchNorm is exactly cancelled by the mean subtraction.
    """
    h1, in_dim = params["w1"].shape
    h2 = params["w2"].shape[0]
    h3 = params["w3"].shape[0]
    latent = params["wmu"].shape[0]
    lp = latent_pad
    hp1, hp2, hp3 = _round_up(h1), _round_up(h2), _round_up(h3)

    def pad_t(w, rows, cols):
        # (out, in) torch layout -> transpose to (in, out), zero-pad to (rows, cols).
        wt = jnp.transpose(w).astype(jnp.float32)
        return jnp.zeros((rows, cols), jnp.float32).at[:wt.shape[0], :wt.shape[1]].set(wt)

    w1 = pad_t(params["w1"], in_dim, hp1)     # (in, hp1)
    w2 = pad_t(params["w2"], hp1, hp2)        # (hp1, hp2) — padded rows hit zeroed cols
    w3 = pad_t(params["w3"], hp2, hp3)        # (hp2, hp3)
    wmu_t = pad_t(params["wmu"], hp3, lp)     # (hp3, lp)
    wcon_t = pad_t(params["wcon"], hp3, lp)   # (hp3, lp)
    wh = jnp.concatenate([wmu_t, wcon_t], axis=1)   # (hp3, 2*lp)

    width = max(hp1, hp2, hp3, 2 * lp)
    slab = jnp.zeros((8, width), jnp.float32)
    slab = slab.at[0, :h1].set(params["g1"])
    slab = slab.at[1, :h1].set(params["be1"])
    slab = slab.at[2, :h2].set(params["g2"])
    slab = slab.at[3, :h2].set(params["be2"])
    slab = slab.at[4, :h3].set(params["g3"])
    slab = slab.at[5, :h3].set(params["be3"])
    slab = slab.at[6, :latent].set(params["bmu"])
    slab = slab.at[6, lp:lp + latent].set(params["bcon"])

    return {
        "w1": w1, "w2": w2, "w3": w3, "wh": wh, "slab": slab,
        "dims": (hp1, hp2, hp3, lp, latent),
    }


@functools.partial(jax.jit, static_argnames=("dims",))
def encoder_forward(x, w1, w2, w3, wh, slab, noise_pad, dims):
    """x: (B, input_dim) f32.  noise_pad: (B, latent_pad) standard normal."""
    hp1, hp2, hp3, lp, latent = dims
    batch, in_dim = x.shape

    kernel = functools.partial(_encoder_kernel, hp1=hp1, hp2=hp2, hp3=hp3, lp=lp)
    vmem = pl.BlockSpec(memory_space=pltpu.MemorySpace.VMEM)

    flops = 2 * batch * (in_dim * hp1 + hp1 * hp2 + hp2 * hp3 + hp3 * 2 * lp)
    bytes_accessed = 4 * (x.size + w1.size + w2.size + w3.size + wh.size
                          + slab.size + noise_pad.size + batch * 3 * lp)
    cost = pl.CostEstimate(flops=flops,
                           transcendentals=batch * lp + hp1 + hp2 + hp3,
                           bytes_accessed=bytes_accessed)

    # VMEM budget: operands + activations (incl. the [y|y*y] concat) + output.
    # Sized against v7x (64 MiB physical, 32 MiB scoped default); scale the
    # per-call batch so this stays comfortably under ~48 MiB, else tile batch.
    act_bytes = 4 * batch * (in_dim + 3 * (hp1 + hp2 + hp3) + 6 * lp)
    vmem_need = bytes_accessed + act_bytes + (2 << 20)
    assert vmem_need <= (48 << 20), (
        "per-call batch too large for single-shot VMEM residency; tile batch")
    vmem_limit = int(min(max(vmem_need, 32 << 20), 48 << 20))

    out = pl.pallas_call(
        kernel,
        out_shape=jax.ShapeDtypeStruct((batch, 3 * lp), jnp.float32),
        in_specs=[vmem] * 7,
        out_specs=vmem,
        cost_estimate=cost,
        compiler_params=pltpu.CompilerParams(vmem_limit_bytes=vmem_limit),
    )(x, w1, w2, w3, wh, slab, noise_pad)

    z = out[:, :latent]
    mu = out[:, lp:lp + latent]
    log_sigma = out[:, 2 * lp:2 * lp + latent]
    return z, mu, log_sigma


def init_params(key, input_dim, inter_dims, latent_dim):
    """Deterministic synthetic init (stands in for init_weights)."""
    dims = [input_dim] + list(inter_dims)
    params = {}
    keys = jax.random.split(key, 16)
    ki = 0
    for i in range(3):
        in_c, out_c = dims[i], dims[i + 1]
        params[f"w{i+1}"] = 0.05 * jax.random.normal(keys[ki], (out_c, in_c), jnp.float32); ki += 1
        params[f"b{i+1}"] = 0.01 * jax.random.normal(keys[ki], (out_c,), jnp.float32); ki += 1
        params[f"g{i+1}"] = 1.0 + 0.05 * jax.random.normal(keys[ki], (out_c,), jnp.float32); ki += 1
        params[f"be{i+1}"] = 0.05 * jax.random.normal(keys[ki], (out_c,), jnp.float32); ki += 1
    params["wmu"] = 0.05 * jax.random.normal(keys[ki], (latent_dim, inter_dims[-1]), jnp.float32); ki += 1
    params["bmu"] = 0.01 * jax.random.normal(keys[ki], (latent_dim,), jnp.float32); ki += 1
    params["wcon"] = 0.05 * jax.random.normal(keys[ki], (latent_dim, inter_dims[-1]), jnp.float32); ki += 1
    params["bcon"] = 0.01 * jax.random.normal(keys[ki], (latent_dim,), jnp.float32); ki += 1
    return params


def reference_forward(x, params, noise):
    """Pure-JAX reference matching the PyTorch forward (training-mode BN, two-pass
    variance, linear biases included — they cancel under BN, so the kernel may
    drop them).  HIGHEST precision pins the reference matmuls to full f32."""
    hp = jax.lax.Precision.HIGHEST
    h = x
    for i in range(3):
        w, b = params[f"w{i+1}"], params[f"b{i+1}"]
        g, be = params[f"g{i+1}"], params[f"be{i+1}"]
        y = jnp.dot(h, w.T, precision=hp) + b
        mean = jnp.mean(y, axis=0, keepdims=True)
        var = jnp.mean((y - mean) ** 2, axis=0, keepdims=True)
        y = (y - mean) / jnp.sqrt(var + BN_EPS) * g + be
        h = jnp.maximum(y, 0.0)
    mu = jnp.dot(h, params["wmu"].T, precision=hp) + params["bmu"]
    ls = jnp.dot(h, params["wcon"].T, precision=hp) + params["bcon"]
    sigma = jnp.exp(0.5 * ls)
    return mu + sigma * noise, mu, ls


if __name__ == "__main__":
    # Shapes consistent with the module (flattened image -> MLP encoder).
    # Batch is deliberately much larger than a toy size (review rec #1): at
    # B=256 the whole working set is still < 2 MiB of VMEM per call.
    batch = 256
    input_dim = 256         # flattened 16x16 single-channel image
    inter_dims = [100, 100, 200]   # non-multiples of 128: exercises lane padding
    latent_dim = 10
    LATENT_PAD = 128        # lane-dense kernel output width per head

    root = jax.random.PRNGKey(0)
    k_param, k_x, k_noise = jax.random.split(root, 3)

    params = init_params(k_param, input_dim, inter_dims, latent_dim)
    prepared = prepare_params(params, latent_pad=LATENT_PAD)   # one-time glue

    # x enters as an "image" and is flattened, mirroring x.view(x.size(0), -1)
    x_img = jax.random.normal(k_x, (batch, 1, 16, 16), jnp.float32)
    x = x_img.reshape(batch, -1)

    # torch.randn_like(mu) -> host-sampled standard-normal noise at the padded
    # lane width so the kernel input is lane-dense.
    noise_pad = jax.random.normal(k_noise, (batch, LATENT_PAD), jnp.float32)

    z, mu, log_sigma = encoder_forward(
        x, prepared["w1"], prepared["w2"], prepared["w3"],
        prepared["wh"], prepared["slab"], noise_pad, dims=prepared["dims"])
    jax.block_until_ready((z, mu, log_sigma))

    z_ref, mu_ref, ls_ref = reference_forward(x, params, noise_pad[:, :latent_dim])
    assert jnp.allclose(mu, mu_ref, atol=1e-4, rtol=1e-4)
    assert jnp.allclose(log_sigma, ls_ref, atol=1e-4, rtol=1e-4)
    assert jnp.allclose(z, z_ref, atol=1e-4, rtol=1e-4)

    print("KERNEL_OK")
</pallas_src>

<mosaic_0001>
module attributes {stable_mosaic.version = 11 : i64} {
  func.func @_encoder_kernel(%arg0: memref<256x256xf32, #tpu.memory_space<vmem>>, %arg1: memref<256x128xf32, #tpu.memory_space<vmem>>, %arg2: memref<128x128xf32, #tpu.memory_space<vmem>>, %arg3: memref<128x256xf32, #tpu.memory_space<vmem>>, %arg4: memref<256x256xf32, #tpu.memory_space<vmem>>, %arg5: memref<8x256xf32, #tpu.memory_space<vmem>>, %arg6: memref<256x128xf32, #tpu.memory_space<vmem>>, %arg7: memref<256x384xf32, #tpu.memory_space<vmem>>) attributes {dimension_semantics = [], scalar_prefetch = 0 : i64, scratch_operands = 0 : i64, tpu.core_type = #tpu.core_type<tc>} {
    %c0 = arith.constant 0 : index
    %c0_0 = arith.constant 0 : index
    %0 = vector.load %arg0[%c0, %c0_0] : memref<256x256xf32, #tpu.memory_space<vmem>>, vector<256x256xf32>
    %c0_1 = arith.constant 0 : index
    %c0_2 = arith.constant 0 : index
    %1 = vector.load %arg5[%c0_1, %c0_2] : memref<8x256xf32, #tpu.memory_space<vmem>>, vector<1x128xf32>
    %c1 = arith.constant 1 : index
    %c0_3 = arith.constant 0 : index
    %2 = vector.load %arg5[%c1, %c0_3] : memref<8x256xf32, #tpu.memory_space<vmem>>, vector<1x128xf32>
    %c0_4 = arith.constant 0 : index
    %c0_5 = arith.constant 0 : index
    %3 = vector.load %arg1[%c0_4, %c0_5] : memref<256x128xf32, #tpu.memory_space<vmem>>, vector<256x128xf32>
    %cst = arith.constant dense<0.000000e+00> : vector<256x128xf32>
    %4 = tpu.matmul %0, %3, %cst {dimension_numbers = #tpu.dot_dimension_numbers<[1], [0], [0], [1], [0, 0, 1, 1], [], []>} : vector<256x256xf32>, vector<256x128xf32>, vector<256x128xf32> -> vector<256x128xf32>
    %5 = arith.mulf %4, %4 : vector<256x128xf32>
    %6 = tpu.concatenate %4, %5 in 1 : vector<256x128xf32>, vector<256x128xf32> -> vector<256x256xf32>
    %cst_6 = arith.constant dense<0.000000e+00> : vector<256xf32>
    %7 = vector.multi_reduction <add>, %6, %cst_6 [0] : vector<256x256xf32> to vector<256xf32>
    %8 = vector.shape_cast %7 : vector<256xf32> to vector<1x256xf32>
    %9 = vector.extract_strided_slice %8 {offsets = [0, 0], sizes = [1, 128], strides = [1, 1]} : vector<1x256xf32> to vector<1x128xf32>
    %cst_7 = arith.constant 3.906250e-03 : f32
    %10 = vector.broadcast %cst_7 : f32 to vector<1x128xf32>
    %11 = arith.mulf %9, %10 : vector<1x128xf32>
    %12 = vector.extract_strided_slice %8 {offsets = [0, 128], sizes = [1, 128], strides = [1, 1]} : vector<1x256xf32> to vector<1x128xf32>
    %cst_8 = arith.constant 3.906250e-03 : f32
    %13 = vector.broadcast %cst_8 : f32 to vector<1x128xf32>
    %14 = arith.mulf %12, %13 : vector<1x128xf32>
    %15 = arith.mulf %11, %11 : vector<1x128xf32>
    %16 = arith.subf %14, %15 : vector<1x128xf32>
    %cst_9 = arith.constant 9.99999974E-6 : f32
    %17 = vector.broadcast %cst_9 : f32 to vector<1x128xf32>
    %18 = arith.addf %16, %17 : vector<1x128xf32>
    %19 = math.rsqrt %18 : vector<1x128xf32>
    %20 = arith.mulf %1, %19 : vector<1x128xf32>
    %21 = arith.mulf %11, %20 : vector<1x128xf32>
    %22 = arith.subf %2, %21 : vector<1x128xf32>
    %23 = vector.broadcast %20 : vector<1x128xf32> to vector<256x128xf32>
    %24 = arith.mulf %4, %23 : vector<256x128xf32>
    %25 = vector.broadcast %22 : vector<1x128xf32> to vector<256x128xf32>
    %26 = arith.addf %24, %25 : vector<256x128xf32>
    %cst_10 = arith.constant 0.000000e+00 : f32
    %27 = vector.broadcast %cst_10 : f32 to vector<256x128xf32>
    %28 = arith.maximumf %26, %27 : vector<256x128xf32>
    %c2 = arith.constant 2 : index
    %c0_11 = arith.constant 0 : index
    %29 = vector.load %arg5[%c2, %c0_11] : memref<8x256xf32, #tpu.memory_space<vmem>>, vector<1x128xf32>
    %c3 = arith.constant 3 : index
    %c0_12 = arith.constant 0 : index
    %30 = vector.load %arg5[%c3, %c0_12] : memref<8x256xf32, #tpu.memory_space<vmem>>, vector<1x128xf32>
    %c0_13 = arith.constant 0 : index
    %c0_14 = arith.constant 0 : index
    %31 = vector.load %arg2[%c0_13, %c0_14] : memref<128x128xf32, #tpu.memory_space<vmem>>, vector<128x128xf32>
    %cst_15 = arith.constant dense<0.000000e+00> : vector<256x128xf32>
    %32 = tpu.matmul %28, %31, %cst_15 {dimension_numbers = #tpu.dot_dimension_numbers<[1], [0], [0], [1], [0, 0, 1, 1], [], []>} : vector<256x128xf32>, vector<128x128xf32>, vector<256x128xf32> -> vector<256x128xf32>
    %33 = arith.mulf %32, %32 : vector<256x128xf32>
    %34 = tpu.concatenate %32, %33 in 1 : vector<256x128xf32>, vector<256x128xf32> -> vector<256x256xf32>
    %cst_16 = arith.constant dense<0.000000e+00> : vector<256xf32>
    %35 = vector.multi_reduction <add>, %34, %cst_16 [0] : vector<256x256xf32> to vector<256xf32>
    %36 = vector.shape_cast %35 : vector<256xf32> to vector<1x256xf32>
    %37 = vector.extract_strided_slice %36 {offsets = [0, 0], sizes = [1, 128], strides = [1, 1]} : vector<1x256xf32> to vector<1x128xf32>
    %cst_17 = arith.constant 3.906250e-03 : f32
    %38 = vector.broadcast %cst_17 : f32 to vector<1x128xf32>
    %39 = arith.mulf %37, %38 : vector<1x128xf32>
    %40 = vector.extract_strided_slice %36 {offsets = [0, 128], sizes = [1, 128], strides = [1, 1]} : vector<1x256xf32> to vector<1x128xf32>
    %cst_18 = arith.constant 3.906250e-03 : f32
    %41 = vector.broadcast %cst_18 : f32 to vector<1x128xf32>
    %42 = arith.mulf %40, %41 : vector<1x128xf32>
    %43 = arith.mulf %39, %39 : vector<1x128xf32>
    %44 = arith.subf %42, %43 : vector<1x128xf32>
    %cst_19 = arith.constant 9.99999974E-6 : f32
    %45 = vector.broadcast %cst_19 : f32 to vector<1x128xf32>
    %46 = arith.addf %44, %45 : vector<1x128xf32>
    %47 = math.rsqrt %46 : vector<1x128xf32>
    %48 = arith.mulf %29, %47 : vector<1x128xf32>
    %49 = arith.mulf %39, %48 : vector<1x128xf32>
    %50 = arith.subf %30, %49 : vector<1x128xf32>
    %51 = vector.broadcast %48 : vector<1x128xf32> to vector<256x128xf32>
    %52 = arith.mulf %32, %51 : vector<256x128xf32>
    %53 = vector.broadcast %50 : vector<1x128xf32> to vector<256x128xf32>
    %54 = arith.addf %52, %53 : vector<256x128xf32>
    %cst_20 = arith.constant 0.000000e+00 : f32
    %55 = vector.broadcast %cst_20 : f32 to vector<256x128xf32>
    %56 = arith.maximumf %54, %55 : vector<256x128xf32>
    %c4 = arith.constant 4 : index
    %c0_21 = arith.constant 0 : index
    %57 = vector.load %arg5[%c4, %c0_21] : memref<8x256xf32, #tpu.memory_space<vmem>>, vector<1x256xf32>
    %c5 = arith.constant 5 : index
    %c0_22 = arith.constant 0 : index
    %58 = vector.load %arg5[%c5, %c0_22] : memref<8x256xf32, #tpu.memory_space<vmem>>, vector<1x256xf32>
    %c0_23 = arith.constant 0 : index
    %c0_24 = arith.constant 0 : index
    %59 = vector.load %arg3[%c0_23, %c0_24] : memref<128x256xf32, #tpu.memory_space<vmem>>, vector<128x256xf32>
    %cst_25 = arith.constant dense<0.000000e+00> : vector<256x256xf32>
    %60 = tpu.matmul %56, %59, %cst_25 {dimension_numbers = #tpu.dot_dimension_numbers<[1], [0], [0], [1], [0, 0, 1, 1], [], []>} : vector<256x128xf32>, vector<128x256xf32>, vector<256x256xf32> -> vector<256x256xf32>
    %61 = arith.mulf %60, %60 : vector<256x256xf32>
    %62 = tpu.concatenate %60, %61 in 1 : vector<256x256xf32>, vector<256x256xf32> -> vector<256x512xf32>
    %cst_26 = arith.constant dense<0.000000e+00> : vector<512xf32>
    %63 = vector.multi_reduction <add>, %62, %cst_26 [0] : vector<256x512xf32> to vector<512xf32>
    %64 = vector.shape_cast %63 : vector<512xf32> to vector<1x512xf32>
    %65 = vector.extract_strided_slice %64 {offsets = [0, 0], sizes = [1, 256], strides = [1, 1]} : vector<1x512xf32> to vector<1x256xf32>
    %cst_27 = arith.constant 3.906250e-03 : f32
    %66 = vector.broadcast %cst_27 : f32 to vector<1x256xf32>
    %67 = arith.mulf %65, %66 : vector<1x256xf32>
    %68 = vector.extract_strided_slice %64 {offsets = [0, 256], sizes = [1, 256], strides = [1, 1]} : vector<1x512xf32> to vector<1x256xf32>
    %cst_28 = arith.constant 3.906250e-03 : f32
    %69 = vector.broadcast %cst_28 : f32 to vector<1x256xf32>
    %70 = arith.mulf %68, %69 : vector<1x256xf32>
    %71 = arith.mulf %67, %67 : vector<1x256xf32>
    %72 = arith.subf %70, %71 : vector<1x256xf32>
    %cst_29 = arith.constant 9.99999974E-6 : f32
    %73 = vector.broadcast %cst_29 : f32 to vector<1x256xf32>
    %74 = arith.addf %72, %73 : vector<1x256xf32>
    %75 = math.rsqrt %74 : vector<1x256xf32>
    %76 = arith.mulf %57, %75 : vector<1x256xf32>
    %77 = arith.mulf %67, %76 : vector<1x256xf32>
    %78 = arith.subf %58, %77 : vector<1x256xf32>
    %79 = vector.broadcast %76 : vector<1x256xf32> to vector<256x256xf32>
    %80 = arith.mulf %60, %79 : vector<256x256xf32>
    %81 = vector.broadcast %78 : vector<1x256xf32> to vector<256x256xf32>
    %82 = arith.addf %80, %81 : vector<256x256xf32>
    %cst_30 = arith.constant 0.000000e+00 : f32
    %83 = vector.broadcast %cst_30 : f32 to vector<256x256xf32>
    %84 = arith.maximumf %82, %83 : vector<256x256xf32>
    %c0_31 = arith.constant 0 : index
    %c0_32 = arith.constant 0 : index
    %85 = vector.load %arg4[%c0_31, %c0_32] : memref<256x256xf32, #tpu.memory_space<vmem>>, vector<256x256xf32>
    %cst_33 = arith.constant dense<0.000000e+00> : vector<256x256xf32>
    %86 = tpu.matmul %84, %85, %cst_33 {dimension_numbers = #tpu.dot_dimension_numbers<[1], [0], [0], [1], [0, 0, 1, 1], [], []>} : vector<256x256xf32>, vector<256x256xf32>, vector<256x256xf32> -> vector<256x256xf32>
    %c6 = arith.constant 6 : index
    %c0_34 = arith.constant 0 : index
    %87 = vector.load %arg5[%c6, %c0_34] : memref<8x256xf32, #tpu.memory_space<vmem>>, vector<1x256xf32>
    %88 = vector.broadcast %87 : vector<1x256xf32> to vector<256x256xf32>
    %89 = arith.addf %86, %88 : vector<256x256xf32>
    %90 = vector.extract_strided_slice %89 {offsets = [0, 0], sizes = [256, 128], strides = [1, 1]} : vector<256x256xf32> to vector<256x128xf32>
    %91 = vector.extract_strided_slice %89 {offsets = [0, 128], sizes = [256, 128], strides = [1, 1]} : vector<256x256xf32> to vector<256x128xf32>
    %cst_35 = arith.constant 5.000000e-01 : f32
    %92 = vector.broadcast %cst_35 : f32 to vector<256x128xf32>
    %93 = arith.mulf %91, %92 : vector<256x128xf32>
    %94 = math.exp %93 : vector<256x128xf32>
    %c0_36 = arith.constant 0 : index
    %c0_37 = arith.constant 0 : index
    %95 = vector.load %arg6[%c0_36, %c0_37] : memref<256x128xf32, #tpu.memory_space<vmem>>, vector<256x128xf32>
    %96 = arith.mulf %94, %95 : vector<256x128xf32>
    %97 = arith.addf %90, %96 : vector<256x128xf32>
    %c0_38 = arith.constant 0 : index
    %c0_39 = arith.constant 0 : index
    %98 = vector.load %arg7[%c0_38, %c0_39] : memref<256x384xf32, #tpu.memory_space<vmem>>, vector<256x128xf32>
    tpu.vector_store %arg7[%c0_38, %c0_39], %97 {strides = array<i32>} : memref<256x384xf32, #tpu.memory_space<vmem>>, vector<256x128xf32>,
    %c0_40 = arith.constant 0 : index
    %c128 = arith.constant 128 : index
    %99 = vector.load %arg7[%c0_40, %c128] : memref<256x384xf32, #tpu.memory_space<vmem>>, vector<256x128xf32>
    tpu.vector_store %arg7[%c0_40, %c128], %90 {strides = array<i32>} : memref<256x384xf32, #tpu.memory_space<vmem>>, vector<256x128xf32>,
    %c0_41 = arith.constant 0 : index
    %c256 = arith.constant 256 : index
    %100 = vector.load %arg7[%c0_41, %c256] : memref<256x384xf32, #tpu.memory_space<vmem>>, vector<256x128xf32>
    tpu.vector_store %arg7[%c0_41, %c256], %91 {strides = array<i32>} : memref<256x384xf32, #tpu.memory_space<vmem>>, vector<256x128xf32>,
    return
  }
}

</mosaic_0001>

<llo_original>
// kernel: encoder_forward.1
$region0: #{encoder_forward.1}
  #allocation0 [shape = 'u32[]', space=smem, size = 0x4, offset = 0x4, fixed_abs, tag = 'smem constant byte address 0x4 - core index']
  #allocation1 [shape = 'u32[144,128]{1,0:T(1,128)}', space=vmem, size = 0x12000, scoped, tag = 'internal scratch']
  %s0 = inlined_call_operand.hbm [shape: f32[256,256], index: 0, kind: input, shape index: {}]
  %s1 = inlined_call_operand.hbm [shape: f32[256,128], index: 1, kind: input, shape index: {}]
  %s2 = inlined_call_operand.hbm [shape: f32[128,128], index: 2, kind: input, shape index: {}]
  %s3 = inlined_call_operand.hbm [shape: f32[128,256], index: 3, kind: input, shape index: {}]
  %s4 = inlined_call_operand.hbm [shape: f32[256,256], index: 4, kind: input, shape index: {}]
  %s5 = inlined_call_operand.vmem [shape: f32[8,256], index: 5, kind: input, shape index: {}]
  %s6 = inlined_call_operand.hbm [shape: f32[256,128], index: 6, kind: input, shape index: {}]
  %s7 = inlined_call_operand.vmem [shape: f32[256,384], index: 7, kind: output, shape index: {}]
  %s8 = sld [smem:[#allocation0]]
  $region62: #{encoder_forward.1} parent=0
    _
  %s10 = ssub.s32 1, %s8
  %s11 = scalar_select 0, %s10, %s8
  $region1: #{encoder_forward.1} parent=0
    #allocation2 [shape = 'u8[262144]{0}', space=vmem, size = 0x40000, scoped, tag = 'input window, operand 0, single buffered']
    #allocation3 [shape = 's32[1]{0}', space=sflag, size = 0x4, scoped, tag = 'scoped memory for encoder_forward.1']
    #allocation4 [shape = 'u8[131072]{0}', space=vmem, size = 0x20000, scoped, tag = 'input window, operand 1, single buffered']
    #allocation5 [shape = 's32[1]{0}', space=sflag, size = 0x4, scoped, tag = 'scoped memory for encoder_forward.1']
    #allocation6 [shape = 'u8[65536]{0}', space=vmem, size = 0x10000, scoped, tag = 'input window, operand 2, single buffered']
    #allocation7 [shape = 'u8[131072]{0}', space=vmem, size = 0x20000, scoped, tag = 'input window, operand 3, single buffered']
    #allocation8 [shape = 's32[1]{0}', space=sflag, size = 0x4, scoped, tag = 'scoped memory for encoder_forward.1']
    #allocation9 [shape = 'u8[262144]{0}', space=vmem, size = 0x40000, scoped, tag = 'input window, operand 4, single buffered']
    #allocation10 [shape = 'u8[131072]{0}', space=vmem, size = 0x20000, scoped, tag = 'input window, operand 6, single buffered']
    #allocation11 [shape = 's32[1]{0}', space=sflag, size = 0x4, scoped, tag = 'scoped memory for encoder_forward.1']
    %12 = vsyncpa [#allocation3], 0
    %13 = vsyncpa [#allocation5], 0
    %14 = vsyncpa [#allocation8], 0
    %15 = vsyncpa [#allocation11], 0
    // Predicated region
    $region2: #{encoder_forward.1} parent=1 // pred_check
      _
    $region3: #{encoder_forward.1} parent=1 // pred_check_branch
      %17 = sbr.rel (0) target = $region5
    $region4: #{encoder_forward.1} parent=1 // pred_region
      %s19 = ssub.s32 8192, 8192
      %20 = vsyncadd [#allocation3], %s19
      %s21 = sshll.u32 [#allocation2], 4
      %s22 = int_to_ptr.vmem [resolvable:$true] %s21
      %27 = dma.hbm_to_vmem [thread:$0]  %s0, 8192, %s22, [#allocation3], 256, 256, 16
    $region5: #{encoder_forward.1} parent=1 // pred_fallthru
      _
    // Predicated region
    $region6: #{encoder_forward.1} parent=1 // pred_check
      _
    $region7: #{encoder_forward.1} parent=1 // pred_check_branch
      %29 = sbr.rel (0) target = $region9
    $region8: #{encoder_forward.1} parent=1 // pred_region
      %s31 = ssub.s32 4096, 4096
      %32 = vsyncadd [#allocation5], %s31
      %s33 = sshll.u32 [#allocation4], 4
      %s34 = int_to_ptr.vmem [resolvable:$true] %s33
      %39 = dma.hbm_to_vmem [thread:$0]  %s1, 4096, %s34, [#allocation5], 128, 128, 8
    $region9: #{encoder_forward.1} parent=1 // pred_fallthru
      _
    // Predicated region
    $region10: #{encoder_forward.1} parent=1 // pred_check
      _
    $region11: #{encoder_forward.1} parent=1 // pred_check_branch
      %41 = sbr.rel (0) target = $region13
    $region12: #{encoder_forward.1} parent=1 // pred_region
      %s43 = ssub.s32 2048, 2048
      %44 = vsyncadd [#allocation5], %s43
      %s45 = sshll.u32 [#allocation6], 4
      %s46 = int_to_ptr.vmem [resolvable:$true] %s45
      %51 = dma.hbm_to_vmem [thread:$0]  %s2, 2048, %s46, [#allocation5], 128, 128, 8
    $region13: #{encoder_forward.1} parent=1 // pred_fallthru
      _
    // Predicated region
    $region14: #{encoder_forward.1} parent=1 // pred_check
      _
    $region15: #{encoder_forward.1} parent=1 // pred_check_branch
      %53 = sbr.rel (0) target = $region17
    $region16: #{encoder_forward.1} parent=1 // pred_region
      %s55 = ssub.s32 4096, 4096
      %56 = vsyncadd [#allocation8], %s55
      %s57 = sshll.u32 [#allocation7], 4
      %s58 = int_to_ptr.vmem [resolvable:$true] %s57
      %63 = dma.hbm_to_vmem [thread:$0]  %s3, 4096, %s58, [#allocation8], 256, 256, 16
    $region17: #{encoder_forward.1} parent=1 // pred_fallthru
      _
    // Predicated region
    $region18: #{encoder_forward.1} parent=1 // pred_check
      _
    $region19: #{encoder_forward.1} parent=1 // pred_check_branch
      %65 = sbr.rel (0) target = $region21
    $region20: #{encoder_forward.1} parent=1 // pred_region
      %s67 = ssub.s32 8192, 8192
      %68 = vsyncadd [#allocation8], %s67
      %s69 = sshll.u32 [#allocation9], 4
      %s70 = int_to_ptr.vmem [resolvable:$true] %s69
      %75 = dma.hbm_to_vmem [thread:$0]  %s4, 8192, %s70, [#allocation8], 256, 256, 16
    $region21: #{encoder_forward.1} parent=1 // pred_fallthru
      _
    // Predicated region
    $region22: #{encoder_forward.1} parent=1 // pred_check
      _
    $region23: #{encoder_forward.1} parent=1 // pred_check_branch
      %77 = sbr.rel (0) target = $region25
    $region24: #{encoder_forward.1} parent=1 // pred_region
      _
    $region25: #{encoder_forward.1} parent=1 // pred_fallthru
      _
    // Predicated region
    $region26: #{encoder_forward.1} parent=1 // pred_check
      _
    $region27: #{encoder_forward.1} parent=1 // pred_check_branch
      %79 = sbr.rel (0) target = $region29
    $region28: #{encoder_forward.1} parent=1 // pred_region
      %s81 = ssub.s32 4096, 4096
      %82 = vsyncadd [#allocation11], %s81
      %s83 = sshll.u32 [#allocation10], 4
      %s84 = int_to_ptr.vmem [resolvable:$true] %s83
      %89 = dma.hbm_to_vmem [thread:$0]  %s6, 4096, %s84, [#allocation11], 128, 128, 8
    $region29: #{encoder_forward.1} parent=1 // pred_fallthru
      _
    // Predicated region
    $region30: #{encoder_forward.1} parent=1 // pred_check
      _
    $region31: #{encoder_forward.1} parent=1 // pred_check_branch
      %91 = sbr.rel (0) target = $region33
    $region32: #{encoder_forward.1} parent=1 // pred_region
      %92 = dma.done [#allocation3], 8192
    $region33: #{encoder_forward.1} parent=1 // pred_fallthru
      _
    // Predicated region
    $region34: #{encoder_forward.1} parent=1 // pred_check
      _
    $region35: #{encoder_forward.1} parent=1 // pred_check_branch
      %94 = sbr.rel (0) target = $region37
    $region36: #{encoder_forward.1} parent=1 // pred_region
      %95 = dma.done [#allocation5], 4096
    $region37: #{encoder_forward.1} parent=1 // pred_fallthru
      _
    // Predicated region
    $region38: #{encoder_forward.1} parent=1 // pred_check
      _
    $region39: #{encoder_forward.1} parent=1 // pred_check_branch
      %97 = sbr.rel (0) target = $region41
    $region40: #{encoder_forward.1} parent=1 // pred_region
      %98 = dma.done [#allocation5], 2048
    $region41: #{encoder_forward.1} parent=1 // pred_fallthru
      _
    // Predicated region
    $region42: #{encoder_forward.1} parent=1 // pred_check
      _
    $region43: #{encoder_forward.1} parent=1 // pred_check_branch
      %100 = sbr.rel (0) target = $region45
    $region44: #{encoder_forward.1} parent=1 // pred_region
      %101 = dma.done [#allocation8], 4096
    $region45: #{encoder_forward.1} parent=1 // pred_fallthru
      _
    // Predicated region
    $region46: #{encoder_forward.1} parent=1 // pred_check
      _
    $region47: #{encoder_forward.1} parent=1 // pred_check_branch
      %103 = sbr.rel (0) target = $region49
    $region48: #{encoder_forward.1} parent=1 // pred_region
      %104 = dma.done [#allocation8], 8192
    $region49: #{encoder_forward.1} parent=1 // pred_fallthru
      _
    // Predicated region
    $region50: #{encoder_forward.1} parent=1 // pred_check
      _
    $region51: #{encoder_forward.1} parent=1 // pred_check_branch
      %106 = sbr.rel (0) target = $region53
    $region52: #{encoder_forward.1} parent=1 // pred_region
      %107 = dma.done [#allocation11], 4096
    $region53: #{encoder_forward.1} parent=1 // pred_fallthru
      _
    %v108 = vld [vmem:[#allocation2] sm:$0xff]
    %v109 = vld [vmem:[#allocation2 + $0x8] sm:$0xff]
    %v110 = vld [vmem:[#allocation2 + $0x10] sm:$0xff]
    %v111 = vld [vmem:[#allocation2 + $0x18] sm:$0xff]
    %v112 = vld [vmem:[#allocation2 + $0x20] sm:$0xff]
    %v113 = vld [vmem:[#allocation2 + $0x28] sm:$0xff]
    %v114 = vld [vmem:[#allocation2 + $0x30] sm:$0xff]
    %v115 = vld [vmem:[#allocation2 + $0x38] sm:$0xff]
    %v116 = vld [vmem:[#allocation2 + $0x40] sm:$0xff]
    %v117 = vld [vmem:[#allocation2 + $0x48] sm:$0xff]
    %v118 = vld [vmem:[#allocation2 + $0x50] sm:$0xff]
    %v119 = vld [vmem:[#allocation2 + $0x58] sm:$0xff]
    %v120 = vld [vmem:[#allocation2 + $0x60] sm:$0xff]
    %v121 = vld [vmem:[#allocation2 + $0x68] sm:$0xff]
    %v122 = vld [vmem:[#allocation2 + $0x70] sm:$0xff]
    %v123 = vld [vmem:[#allocation2 + $0x78] sm:$0xff]
    %v124 = vld [vmem:[#allocation2 + $0x80] sm:$0xff]
    %v125 = vld [vmem:[#allocation2 + $0x88] sm:$0xff]
    %v126 = vld [vmem:[#allocation2 + $0x90] sm:$0xff]
    %v127 = vld [vmem:[#allocation2 + $0x98] sm:$0xff]
    %v128 = vld [vmem:[#allocation2 + $0xa0] sm:$0xff]
    %v129 = vld [vmem:[#allocation2 + $0xa8] sm:$0xff]
    %v130 = vld [vmem:[#allocation2 + $0xb0] sm:$0xff]
    %v131 = vld [vmem:[#allocation2 + $0xb8] sm:$0xff]
    %v132 = vld [vmem:[#allocation2 + $0xc0] sm:$0xff]
    %v133 = vld [vmem:[#allocation2 + $0xc8] sm:$0xff]
    %v134 = vld [vmem:[#allocation2 + $0xd0] sm:$0xff]
    %v135 = vld [vmem:[#allocation2 + $0xd8] sm:$0xff]
    %v136 = vld [vmem:[#allocation2 + $0xe0] sm:$0xff]
    %v137 = vld [vmem:[#allocation2 + $0xe8] sm:$0xff]
    %v138 = vld [vmem:[#allocation2 + $0xf0] sm:$0xff]
    %v139 = vld [vmem:[#allocation2 + $0xf8] sm:$0xff]
    %v140 = vld [vmem:[#allocation2 + $0x100] sm:$0xff]
    %v141 = vld [vmem:[#allocation2 + $0x108] sm:$0xff]
    %v142 = vld [vmem:[#allocation2 + $0x110] sm:$0xff]
    %v143 = vld [vmem:[#allocation2 + $0x118] sm:$0xff]
    %v144 = vld [vmem:[#allocation2 + $0x120] sm:$0xff]
    %v145 = vld [vmem:[#allocation2 + $0x128] sm:$0xff]
    %v146 = vld [vmem:[#allocation2 + $0x130] sm:$0xff]
    %v147 = vld [vmem:[#allocation2 + $0x138] sm:$0xff]
    %v148 = vld [vmem:[#allocation2 + $0x140] sm:$0xff]
    %v149 = vld [vmem:[#allocation2 + $0x148] sm:$0xff]
    %v150 = vld [vmem:[#allocation2 + $0x150] sm:$0xff]
    %v151 = vld [vmem:[#allocation2 + $0x158] sm:$0xff]
    %v152 = vld [vmem:[#allocation2 + $0x160] sm:$0xff]
    %v153 = vld [vmem:[#allocation2 + $0x168] sm:$0xff]
    %v154 = vld [vmem:[#allocation2 + $0x170] sm:$0xff]
    %v155 = vld [vmem:[#allocation2 + $0x178] sm:$0xff]
    %v156 = vld [vmem:[#allocation2 + $0x180] sm:$0xff]
    %v157 = vld [vmem:[#allocation2 + $0x188] sm:$0xff]
    %v158 = vld [vmem:[#allocation2 + $0x190] sm:$0xff]
    %v159 = vld [vmem:[#allocation2 + $0x198] sm:$0xff]
    %v160 = vld [vmem:[#allocation2 + $0x1a0] sm:$0xff]
    %v161 = vld [vmem:[#allocation2 + $0x1a8] sm:$0xff]
    %v162 = vld [vmem:[#allocation2 + $0x1b0] sm:$0xff]
    %v163 = vld [vmem:[#allocation2 + $0x1b8] sm:$0xff]
    %v164 = vld [vmem:[#allocation2 + $0x1c0] sm:$0xff]
    %v165 = vld [vmem:[#allocation2 + $0x1c8] sm:$0xff]
    %v166 = vld [vmem:[#allocation2 + $0x1d0] sm:$0xff]
    %v167 = vld [vmem:[#allocation2 + $0x1d8] sm:$0xff]
    %v168 = vld [vmem:[#allocation2 + $0x1e0] sm:$0xff]
    %v169 = vld [vmem:[#allocation2 + $0x1e8] sm:$0xff]
    %v170 = vld [vmem:[#allocation2 + $0x1f0] sm:$0xff]
    %v171 = vld [vmem:[#allocation2 + $0x1f8] sm:$0xff]
    %v172 = vld [vmem:[%s5] ss:$0 sm:$0xff]
    %v173 = vld [vmem:[%s5 + $0x1] ss:$0 sm:$0xff]
    %v174 = vld [vmem:[#allocation4] sm:$0xff]
    %v175 = vld [vmem:[#allocation4 + $0x8] sm:$0xff]
    %v176 = vld [vmem:[#allocation4 + $0x10] sm:$0xff]
    %v177 = vld [vmem:[#allocation4 + $0x18] sm:$0xff]
    %v178 = vld [vmem:[#allocation4 + $0x20] sm:$0xff]
    %v179 = vld [vmem:[#allocation4 + $0x28] sm:$0xff]
    %v180 = vld [vmem:[#allocation4 + $0x30] sm:$0xff]
    %v181 = vld [vmem:[#allocation4 + $0x38] sm:$0xff]
    %v182 = vld [vmem:[#allocation4 + $0x40] sm:$0xff]
    %v183 = vld [vmem:[#allocation4 + $0x48] sm:$0xff]
    %v184 = vld [vmem:[#allocation4 + $0x50] sm:$0xff]
    %v185 = vld [vmem:[#allocation4 + $0x58] sm:$0xff]
    %v186 = vld [vmem:[#allocation4 + $0x60] sm:$0xff]
    %v187 = vld [vmem:[#allocation4 + $0x68] sm:$0xff]
    %v188 = vld [vmem:[#allocation4 + $0x70] sm:$0xff]
    %v189 = vld [vmem:[#allocation4 + $0x78] sm:$0xff]
    %v190 = vld [vmem:[#allocation4 + $0x80] sm:$0xff]
    %v191 = vld [vmem:[#allocation4 + $0x88] sm:$0xff]
    %v192 = vld [vmem:[#allocation4 + $0x90] sm:$0xff]
    %v193 = vld [vmem:[#allocation4 + $0x98] sm:$0xff]
    %v194 = vld [vmem:[#allocation4 + $0xa0] sm:$0xff]
    %v195 = vld [vmem:[#allocation4 + $0xa8] sm:$0xff]
    %v196 = vld [vmem:[#allocation4 + $0xb0] sm:$0xff]
    %v197 = vld [vmem:[#allocation4 + $0xb8] sm:$0xff]
    %v198 = vld [vmem:[#allocation4 + $0xc0] sm:$0xff]
    %v199 = vld [vmem:[#allocation4 + $0xc8] sm:$0xff]
    %v200 = vld [vmem:[#allocation4 + $0xd0] sm:$0xff]
    %v201 = vld [vmem:[#allocation4 + $0xd8] sm:$0xff]
    %v202 = vld [vmem:[#allocation4 + $0xe0] sm:$0xff]
    %v203 = vld [vmem:[#allocation4 + $0xe8] sm:$0xff]
    %v204 = vld [vmem:[#allocation4 + $0xf0] sm:$0xff]
    %v205 = vld [vmem:[#allocation4 + $0xf8] sm:$0xff]
    %206 = vmatprep.subr.mxu0 0.0
    %207 = vmatpush1.msra.mxu0 %v174
    %208 = vmatprep.subr.mxu0 0.0
    %209 = vmatpush1.msra.mxu0 %v175
    %210 = vmatprep.subr.mxu0 0.0
    %211 = vmatpush1.msra.mxu0 %v176
    %212 = vmatprep.subr.mxu0 0.0
    %213 = vmatpush1.msra.mxu0 %v177
    %214 = vmatprep.subr.mxu0 0.0
    %215 = vmatpush1.msra.mxu0 %v178
    %216 = vmatprep.subr.mxu0 0.0
    %217 = vmatpush1.msra.mxu0 %v179
    %218 = vmatprep.subr.mxu0 0.0
    %219 = vmatpush1.msra.mxu0 %v180
    %220 = vmatprep.subr.mxu0 0.0
    %221 = vmatpush1.msra.mxu0 %v181
    %222 = vmatprep.subr.mxu0 0.0
    %223 = vmatpush1.msra.mxu0 %v182
    %224 = vmatprep.subr.mxu0 0.0
    %225 = vmatpush1.msra.mxu0 %v183
    %226 = vmatprep.subr.mxu0 0.0
    %227 = vmatpush1.msra.mxu0 %v184
    %228 = vmatprep.subr.mxu0 0.0
    %229 = vmatpush1.msra.mxu0 %v185
    %230 = vmatprep.subr.mxu0 0.0
    %231 = vmatpush1.msra.mxu0 %v186
    %232 = vmatprep.subr.mxu0 0.0
    %233 = vmatpush1.msra.mxu0 %v187
    %234 = vmatprep.subr.mxu0 0.0
    %235 = vmatpush1.msra.mxu0 %v188
    %236 = vmatprep.subr.mxu0 0.0
    %237 = vmatpush1.msra.mxu0 %v189
    %238 = vmatprep.subr.mxu0 0.0
    %239 = vmatpush1.msra.mxu0 %v190
    %240 = vmatprep.subr.mxu0 0.0
    %241 = vmatpush1.msra.mxu0 %v191
    %242 = vmatprep.subr.mxu0 0.0
    %243 = vmatpush1.msra.mxu0 %v192
    %244 = vmatprep.subr.mxu0 0.0
    %245 = vmatpush1.msra.mxu0 %v193
    %246 = vmatprep.subr.mxu0 0.0
    %247 = vmatpush1.msra.mxu0 %v194
    %248 = vmatprep.subr.mxu0 0.0
    %249 = vmatpush1.msra.mxu0 %v195
    %250 = vmatprep.subr.mxu0 0.0
    %251 = vmatpush1.msra.mxu0 %v196
    %252 = vmatprep.subr.mxu0 0.0
    %253 = vmatpush1.msra.mxu0 %v197
    %254 = vmatprep.subr.mxu0 0.0
    %255 = vmatpush1.msra.mxu0 %v198
    %256 = vmatprep.subr.mxu0 0.0
    %257 = vmatpush1.msra.mxu0 %v199
    %258 = vmatprep.subr.mxu0 0.0
    %259 = vmatpush1.msra.mxu0 %v200
    %260 = vmatprep.subr.mxu0 0.0
    %261 = vmatpush1.msra.mxu0 %v201
    %262 = vmatprep.subr.mxu0 0.0
    %263 = vmatpush1.msra.mxu0 %v202
    %264 = vmatprep.subr.mxu0 0.0
    %265 = vmatpush1.msra.mxu0 %v203
    %266 = vmatprep.subr.mxu0 0.0
    %267 = vmatpush1.msra.mxu0 %v204
    %268 = vmatprep.subr.mxu0 0.0
    %269 = vmatpush1.msra.mxu0 %v205
    %270 = vmatprep.mubr.f32.mxu0 %v109
    %271 = vmatmul.mubr.f32.gmra.mrb[0].mxu0 %v108
    %v272 = vpop.f32.mrb[0].mxu0
    %v273 = vadd.f32 0.0, %v272
    %v274 = vpop.f32.mrb[0].mxu0
    %275 = vmatprep.mubr.f32.mxu0 %v111
    %276 = vmatmul.mubr.f32.gmra.mrb[0].mxu0 %v110
    %v277 = vpop.f32.mrb[0].mxu0
    %v278 = vadd.f32 0.0, %v277
    %v279 = vpop.f32.mrb[0].mxu0
    %280 = vmatprep.mubr.f32.mxu0 %v113
    %281 = vmatmul.mubr.f32.gmra.mrb[0].mxu0 %v112
    %v282 = vpop.f32.mrb[0].mxu0
    %v283 = vadd.f32 0.0, %v282
    %v284 = vpop.f32.mrb[0].mxu0
    %285 = vmatprep.mubr.f32.mxu0 %v115
    %286 = vmatmul.mubr.f32.gmra.mrb[0].mxu0 %v114
    %v287 = vpop.f32.mrb[0].mxu0
    %v288 = vadd.f32 0.0, %v287
    %v289 = vpop.f32.mrb[0].mxu0
    %290 = vmatprep.mubr.f32.mxu0 %v117
    %291 = vmatmul.mubr.f32.gmra.mrb[0].mxu0 %v116
    %v292 = vpop.f32.mrb[0].mxu0
    %v293 = vadd.f32 0.0, %v292
    %v294 = vpop.f32.mrb[0].mxu0
    %295 = vmatprep.mubr.f32.mxu0 %v119
    %296 = vmatmul.mubr.f32.gmra.mrb[0].mxu0 %v118
    %v297 = vpop.f32.mrb[0].mxu0
    %v298 = vadd.f32 0.0, %v297
    %v299 = vpop.f32.mrb[0].mxu0
    %300 = vmatprep.mubr.f32.mxu0 %v121
    %301 = vmatmul.mubr.f32.gmra.mrb[0].mxu0 %v120
    %v302 = vpop.f32.mrb[0].mxu0
    %v303 = vadd.f32 0.0, %v302
    %v304 = vpop.f32.mrb[0].mxu0
    %305 = vmatprep.mubr.f32.mxu0 %v123
    %306 = vmatmul.mubr.f32.gmra.mrb[0].mxu0 %v122
    %v307 = vpop.f32.mrb[0].mxu0
    %v308 = vadd.f32 0.0, %v307
    %v309 = vpop.f32.mrb[0].mxu0
    %310 = vmatprep.mubr.f32.mxu0 %v125
    %311 = vmatmul.mubr.f32.gmra.mrb[0].mxu0 %v124
    %v312 = vpop.f32.mrb[0].mxu0
    %v313 = vadd.f32 0.0, %v312
    %v314 = vpop.f32.mrb[0].mxu0
    %315 = vmatprep.mubr.f32.mxu0 %v127
    %316 = vmatmul.mubr.f32.gmra.mrb[0].mxu0 %v126
    %v317 = vpop.f32.mrb[0].mxu0
    %v318 = vadd.f32 0.0, %v317
    %v319 = vpop.f32.mrb[0].mxu0
    %320 = vmatprep.mubr.f32.mxu0 %v129
    %321 = vmatmul.mubr.f32.gmra.mrb[0].mxu0 %v128
    %v322 = vpop.f32.mrb[0].mxu0
    %v323 = vadd.f32 0.0, %v322
    %v324 = vpop.f32.mrb[0].mxu0
    %325 = vmatprep.mubr.f32.mxu0 %v131
    %326 = vmatmul.mubr.f32.gmra.mrb[0].mxu0 %v130
    %v327 = vpop.f32.mrb[0].mxu0
    %v328 = vadd.f32 0.0, %v327
    %v329 = vpop.f32.mrb[0].mxu0
    %330 = vmatprep.mubr.f32.mxu0 %v133
    %331 = vmatmul.mubr.f32.gmra.mrb[0].mxu0 %v132
    %v332 = vpop.f32.mrb[0].mxu0
    %v333 = vadd.f32 0.0, %v332
    %v334 = vpop.f32.mrb[0].mxu0
    %335 = vmatprep.mubr.f32.mxu0 %v135
    %336 = vmatmul.mubr.f32.gmra.mrb[0].mxu0 %v134
    %v337 = vpop.f32.mrb[0].mxu0
    %v338 = vadd.f32 0.0, %v337
    %v339 = vpop.f32.mrb[0].mxu0
    %340 = vmatprep.mubr.f32.mxu0 %v137
    %341 = vmatmul.mubr.f32.gmra.mrb[0].mxu0 %v136
    %v342 = vpop.f32.mrb[0].mxu0
    %v343 = vadd.f32 0.0, %v342
    %v344 = vpop.f32.mrb[0].mxu0
    %345 = vmatprep.mubr.f32.mxu0 %v139
    %346 = vmatmul.mubr.f32.gmra.mrb[0].mxu0 %v138
    %v347 = vpop.f32.mrb[0].mxu0
    %v348 = vadd.f32 0.0, %v347
    %v349 = vpop.f32.mrb[0].mxu0
    %350 = vmatprep.mubr.f32.mxu0 %v141
    %351 = vmatmul.mubr.f32.gmra.mrb[0].mxu0 %v140
    %v352 = vpop.f32.mrb[0].mxu0
    %v353 = vadd.f32 0.0, %v352
    %v354 = vpop.f32.mrb[0].mxu0
    %355 = vmatprep.mubr.f32.mxu0 %v143
    %356 = vmatmul.mubr.f32.gmra.mrb[0].mxu0 %v142
    %v357 = vpop.f32.mrb[0].mxu0
    %v358 = vadd.f32 0.0, %v357
    %v359 = vpop.f32.mrb[0].mxu0
    %360 = vmatprep.mubr.f32.mxu0 %v145
    %361 = vmatmul.mubr.f32.gmra.mrb[0].mxu0 %v144
    %v362 = vpop.f32.mrb[0].mxu0
    %v363 = vadd.f32 0.0, %v362
    %v364 = vpop.f32.mrb[0].mxu0
    %365 = vmatprep.mubr.f32.mxu0 %v147
    %366 = vmatmul.mubr.f32.gmra.mrb[0].mxu0 %v146
    %v367 = vpop.f32.mrb[0].mxu0
    %v368 = vadd.f32 0.0, %v367
    %v369 = vpop.f32.mrb[0].mxu0
    %370 = vmatprep.mubr.f32.mxu0 %v149
    %371 = vmatmul.mubr.f32.gmra.mrb[0].mxu0 %v148
    %v372 = vpop.f32.mrb[0].mxu0
    %v373 = vadd.f32 0.0, %v372
    %v374 = vpop.f32.mrb[0].mxu0
    %375 = vmatprep.mubr.f32.mxu0 %v151
    %376 = vmatmul.mubr.f32.gmra.mrb[0].mxu0 %v150
    %v377 = vpop.f32.mrb[0].mxu0
    %v378 = vadd.f32 0.0, %v377
    %v379 = vpop.f32.mrb[0].mxu0
    %380 = vmatprep.mubr.f32.mxu0 %v153
    %381 = vmatmul.mubr.f32.gmra.mrb[0].mxu0 %v152
    %v382 = vpop.f32.mrb[0].mxu0
    %v383 = vadd.f32 0.0, %v382
    %v384 = vpop.f32.mrb[0].mxu0
    %385 = vmatprep.mubr.f32.mxu0 %v155
    %386 = vmatmul.mubr.f32.gmra.mrb[0].mxu0 %v154
    %v387 = vpop.f32.mrb[0].mxu0
    %v388 = vadd.f32 0.0, %v387
    %v389 = vpop.f32.mrb[0].mxu0
    %390 = vmatprep.mubr.f32.mxu0 %v157
    %391 = vmatmul.mubr.f32.gmra.mrb[0].mxu0 %v156
    %v392 = vpop.f32.mrb[0].mxu0
    %v393 = vadd.f32 0.0, %v392
    %v394 = vpop.f32.mrb[0].mxu0
    %395 = vmatprep.mubr.f32.mxu0 %v159
    %396 = vmatmul.mubr.f32.gmra.mrb[0].mxu0 %v158
    %v397 = vpop.f32.mrb[0].mxu0
    %v398 = vadd.f32 0.0, %v397
    %v399 = vpop.f32.mrb[0].mxu0
    %400 = vmatprep.mubr.f32.mxu0 %v161
    %401 = vmatmul.mubr.f32.gmra.mrb[0].mxu0 %v160
    %v402 = vpop.f32.mrb[0].mxu0
    %v403 = vadd.f32 0.0, %v402
    %v404 = vpop.f32.mrb[0].mxu0
    %405 = vmatprep.mubr.f32.mxu0 %v163
    %406 = vmatmul.mubr.f32.gmra.mrb[0].mxu0 %v162
    %v407 = vpop.f32.mrb[0].mxu0
    %v408 = vadd.f32 0.0, %v407
    %v409 = vpop.f32.mrb[0].mxu0
    %410 = vmatprep.mubr.f32.mxu0 %v165
    %411 = vmatmul.mubr.f32.gmra.mrb[0].mxu0 %v164
    %v412 = vpop.f32.mrb[0].mxu0
    %v413 = vadd.f32 0.0, %v412
    %v414 = vpop.f32.mrb[0].mxu0
    %415 = vmatprep.mubr.f32.mxu0 %v167
    %416 = vmatmul.mubr.f32.gmra.mrb[0].mxu0 %v166
    %v417 = vpop.f32.mrb[0].mxu0
    %v418 = vadd.f32 0.0, %v417
    %v419 = vpop.f32.mrb[0].mxu0
    %420 = vmatprep.mubr.f32.mxu0 %v169
    %421 = vmatmul.mubr.f32.gmra.mrb[0].mxu0 %v168
    %v422 = vpop.f32.mrb[0].mxu0
    %v423 = vadd.f32 0.0, %v422
    %v424 = vpop.f32.mrb[0].mxu0
    %425 = vmatprep.mubr.f32.mxu0 %v171
    %426 = vmatmul.mubr.f32.gmra.mrb[0].mxu0 %v170
    %v427 = vpop.f32.mrb[0].mxu0
    %v428 = vadd.f32 0.0, %v427
    %v429 = vpop.f32.mrb[0].mxu0
    %430 = vdwg.mxu0
    %v431 = vmul.f32 %v273, %v273
    %v432 = vmul.f32 %v278, %v278
    %v433 = vmul.f32 %v283, %v283
    %v434 = vmul.f32 %v288, %v288
    %v435 = vmul.f32 %v293, %v293
    %v436 = vmul.f32 %v298, %v298
    %v437 = vmul.f32 %v303, %v303
    %v438 = vmul.f32 %v308, %v308
    %v439 = vmul.f32 %v313, %v313
    %v440 = vmul.f32 %v318, %v318
    %v441 = vmul.f32 %v323, %v323
    %v442 = vmul.f32 %v328, %v328
    %v443 = vmul.f32 %v333, %v333
    %v444 = vmul.f32 %v338, %v338
    %v445 = vmul.f32 %v343, %v343
    %v446 = vmul.f32 %v348, %v348
    %v447 = vmul.f32 %v353, %v353
    %v448 = vmul.f32 %v358, %v358
    %v449 = vmul.f32 %v363, %v363
    %v450 = vmul.f32 %v368, %v368
    %v451 = vmul.f32 %v373, %v373
    %v452 = vmul.f32 %v378, %v378
    %v453 = vmul.f32 %v383, %v383
    %v454 = vmul.f32 %v388, %v388
    %v455 = vmul.f32 %v393, %v393
    %v456 = vmul.f32 %v398, %v398
    %v457 = vmul.f32 %v403, %v403
    %v458 = vmul.f32 %v408, %v408
    %v459 = vmul.f32 %v413, %v413
    %v460 = vmul.f32 %v418, %v418
    %v461 = vmul.f32 %v423, %v423
    %v462 = vmul.f32 %v428, %v428
    %v463 = vadd.f32 %v273, %v278
    %v464 = vadd.f32 %v463, %v283
    %v465 = vadd.f32 %v464, %v288
    %v466 = vadd.f32 %v465, %v293
    %v467 = vadd.f32 %v466, %v298
    %v468 = vadd.f32 %v467, %v303
    %v469 = vadd.f32 %v468, %v308
    %v470 = vadd.f32 %v469, %v313
    %v471 = vadd.f32 %v470, %v318
    %v472 = vadd.f32 %v471, %v323
    %v473 = vadd.f32 %v472, %v328
    %v474 = vadd.f32 %v473, %v333
    %v475 = vadd.f32 %v474, %v338
    %v476 = vadd.f32 %v475, %v343
    %v477 = vadd.f32 %v476, %v348
    %v478 = vadd.f32 %v477, %v353
    %v479 = vadd.f32 %v478, %v358
    %v480 = vadd.f32 %v479, %v363
    %v481 = vadd.f32 %v480, %v368
    %v482 = vadd.f32 %v481, %v373
    %v483 = vadd.f32 %v482, %v378
    %v484 = vadd.f32 %v483, %v383
    %v485 = vadd.f32 %v484, %v388
    %v486 = vadd.f32 %v485, %v393
    %v487 = vadd.f32 %v486, %v398
    %v488 = vadd.f32 %v487, %v403
    %v489 = vadd.f32 %v488, %v408
    %v490 = vadd.f32 %v489, %v413
    %v491 = vadd.f32 %v490, %v418
    %v492 = vadd.f32 %v491, %v423
    %v493 = vadd.f32 %v492, %v428
    %v494 = vrot.slane %v493, 4
    %v495 = vadd.f32 %v493, %v494
    %v496 = vrot.slane %v495, 2
    %v497 = vadd.f32 %v495, %v496
    %v498 = vrot.slane %v497, 1
    %v499 = vadd.f32 %v497, %v498
    %v500 = vadd.f32 %v431, %v432
    %v501 = vadd.f32 %v500, %v433
    %v502 = vadd.f32 %v501, %v434
    %v503 = vadd.f32 %v502, %v435
    %v504 = vadd.f32 %v503, %v436
    %v505 = vadd.f32 %v504, %v437
    %v506 = vadd.f32 %v505, %v438
    %v507 = vadd.f32 %v506, %v439
    %v508 = vadd.f32 %v507, %v440
    %v509 = vadd.f32 %v508, %v441
    %v510 = vadd.f32 %v509, %v442
    %v511 = vadd.f32 %v510, %v443
    %v512 = vadd.f32 %v511, %v444
    %v513 = vadd.f32 %v512, %v445
    %v514 = vadd.f32 %v513, %v446
    %v515 = vadd.f32 %v514, %v447
    %v516 = vadd.f32 %v515, %v448
    %v517 = vadd.f32 %v516, %v449
    %v518 = vadd.f32 %v517, %v450
    %v519 = vadd.f32 %v518, %v451
    %v520 = vadd.f32 %v519, %v452
    %v521 = vadd.f32 %v520, %v453
    %v522 = vadd.f32 %v521, %v454
    %v523 = vadd.f32 %v522, %v455
    %v524 = vadd.f32 %v523, %v456
    %v525 = vadd.f32 %v524, %v457
    %v526 = vadd.f32 %v525, %v458
    %v527 = vadd.f32 %v526, %v459
    %v528 = vadd.f32 %v527, %v460
    %v529 = vadd.f32 %v528, %v461
    %v530 = vadd.f32 %v529, %v462
    %v531 = vrot.slane %v530, 4
    %v532 = vadd.f32 %v530, %v531
    %v533 = vrot.slane %v532, 2
    %v534 = vadd.f32 %v532, %v533
    %v535 = vrot.slane %v534, 1
    %v536 = vadd.f32 %v534, %v535
    %v537 = vmul.f32 %v499, 0.00390625
    %v538 = vmul.f32 %v536, 0.00390625
    %v539 = vmul.f32 %v537, %v537
    %v540 = vsub.f32 %v538, %v539
    %v541 = vadd.f32 %v540, 1e-05
    %v542 = vrsqrt.pop %v541
    %v543 = vmul.f32 %v172, %v542
    %v544 = vmul.f32 %v537, %v543
    %v545 = vsub.f32 %v173, %v544
    %v546 = vmul.f32 %v273, %v543
    %v547 = vmul.f32 %v278, %v543
    %v548 = vmul.f32 %v283, %v543
    %v549 = vmul.f32 %v288, %v543
    %v550 = vmul.f32 %v293, %v543
    %v551 = vmul.f32 %v298, %v543
    %v552 = vmul.f32 %v303, %v543
    %v553 = vmul.f32 %v308, %v543
    %v554 = vmul.f32 %v313, %v543
    %v555 = vmul.f32 %v318, %v543
    %v556 = vmul.f32 %v323, %v543
    %v557 = vmul.f32 %v328, %v543
    %v558 = vmul.f32 %v333, %v543
    %v559 = vmul.f32 %v338, %v543
    %v560 = vmul.f32 %v343, %v543
    %v561 = vmul.f32 %v348, %v543
    %v562 = vmul.f32 %v353, %v543
    %v563 = vmul.f32 %v358, %v543
    %v564 = vmul.f32 %v363, %v543
    %v565 = vmul.f32 %v368, %v543
    %v566 = vmul.f32 %v373, %v543
    %v567 = vmul.f32 %v378, %v543
    %v568 = vmul.f32 %v383, %v543
    %v569 = vmul.f32 %v388, %v543
    %v570 = vmul.f32 %v393, %v543
    %v571 = vmul.f32 %v398, %v543
    %v572 = vmul.f32 %v403, %v543
    %v573 = vmul.f32 %v408, %v543
    %v574 = vmul.f32 %v413, %v543
    %v575 = vmul.f32 %v418, %v543
    %v576 = vmul.f32 %v423, %v543
    %v577 = vmul.f32 %v428, %v543
    %v578 = vadd.f32 %v546, %v545
    %v579 = vadd.f32 %v547, %v545
    %v580 = vadd.f32 %v548, %v545
    %v581 = vadd.f32 %v549, %v545
    %v582 = vadd.f32 %v550, %v545
    %v583 = vadd.f32 %v551, %v545
    %v584 = vadd.f32 %v552, %v545
    %v585 = vadd.f32 %v553, %v545
    %v586 = vadd.f32 %v554, %v545
    %v587 = vadd.f32 %v555, %v545
    %v588 = vadd.f32 %v556, %v545
    %v589 = vadd.f32 %v557, %v545
    %v590 = vadd.f32 %v558, %v545
    %v591 = vadd.f32 %v559, %v545
    %v592 = vadd.f32 %v560, %v545
    %v593 = vadd.f32 %v561, %v545
    %v594 = vadd.f32 %v562, %v545
    %v595 = vadd.f32 %v563, %v545
    %v596 = vadd.f32 %v564, %v545
    %v597 = vadd.f32 %v565, %v545
    %v598 = vadd.f32 %v566, %v545
    %v599 = vadd.f32 %v567, %v545
    %v600 = vadd.f32 %v568, %v545
    %v601 = vadd.f32 %v569, %v545
    %v602 = vadd.f32 %v570, %v545
    %v603 = vadd.f32 %v571, %v545
    %v604 = vadd.f32 %v572, %v545
    %v605 = vadd.f32 %v573, %v545
    %v606 = vadd.f32 %v574, %v545
    %v607 = vadd.f32 %v575, %v545
    %v608 = vadd.f32 %v576, %v545
    %v609 = vadd.f32 %v577, %v545
    %v610 = vmax.f32 %v578, 0.0
    %v611 = vmax.f32 %v579, 0.0
    %v612 = vmax.f32 %v580, 0.0
    %v613 = vmax.f32 %v581, 0.0
    %v614 = vmax.f32 %v582, 0.0
    %v615 = vmax.f32 %v583, 0.0
    %v616 = vmax.f32 %v584, 0.0
    %v617 = vmax.f32 %v585, 0.0
    %v618 = vmax.f32 %v586, 0.0
    %v619 = vmax.f32 %v587, 0.0
    %v620 = vmax.f32 %v588, 0.0
    %v621 = vmax.f32 %v589, 0.0
    %v622 = vmax.f32 %v590, 0.0
    %v623 = vmax.f32 %v591, 0.0
    %v624 = vmax.f32 %v592, 0.0
    %v625 = vmax.f32 %v593, 0.0
    %v626 = vmax.f32 %v594, 0.0
    %v627 = vmax.f32 %v595, 0.0
    %v628 = vmax.f32 %v596, 0.0
    %v629 = vmax.f32 %v597, 0.0
    %v630 = vmax.f32 %v598, 0.0
    %v631 = vmax.f32 %v599, 0.0
    %v632 = vmax.f32 %v600, 0.0
    %v633 = vmax.f32 %v601, 0.0
    %v634 = vmax.f32 %v602, 0.0
    %v635 = vmax.f32 %v603, 0.0
    %v636 = vmax.f32 %v604, 0.0
    %v637 = vmax.f32 %v605, 0.0
    %v638 = vmax.f32 %v606, 0.0
    %v639 = vmax.f32 %v607, 0.0
    %v640 = vmax.f32 %v608, 0.0
    %v641 = vmax.f32 %v609, 0.0
    %v642 = vld [vmem:[%s5 + $0x2] ss:$0 sm:$0xff]
    %v643 = vld [vmem:[%s5 + $0x3] ss:$0 sm:$0xff]
    %v644 = vld [vmem:[#allocation6] sm:$0xff]
    %v645 = vld [vmem:[#allocation6 + $0x8] sm:$0xff]
    %v646 = vld [vmem:[#allocation6 + $0x10] sm:$0xff]
    %v647 = vld [vmem:[#allocation6 + $0x18] sm:$0xff]
    %v648 = vld [vmem:[#allocation6 + $0x20] sm:$0xff]
    %v649 = vld [vmem:[#allocation6 + $0x28] sm:$0xff]
    %v650 = vld [vmem:[#allocation6 + $0x30] sm:$0xff]
    %v651 = vld [vmem:[#allocation6 + $0x38] sm:$0xff]
    %v652 = vld [vmem:[#allocation6 + $0x40] sm:$0xff]
    %v653 = vld [vmem:[#allocation6 + $0x48] sm:$0xff]
    %v654 = vld [vmem:[#allocation6 + $0x50] sm:$0xff]
    %v655 = vld [vmem:[#allocation6 + $0x58] sm:$0xff]
    %v656 = vld [vmem:[#allocation6 + $0x60] sm:$0xff]
    %v657 = vld [vmem:[#allocation6 + $0x68] sm:$0xff]
    %v658 = vld [vmem:[#allocation6 + $0x70] sm:$0xff]
    %v659 = vld [vmem:[#allocation6 + $0x78] sm:$0xff]
    %660 = vmatprep.subr.mxu0 0.0
    %661 = vmatpush1.msra.mxu0 %v644
    %662 = vmatprep.subr.mxu0 0.0
    %663 = vmatpush1.msra.mxu0 %v645
    %664 = vmatprep.subr.mxu0 0.0
    %665 = vmatpush1.msra.mxu0 %v646
    %666 = vmatprep.subr.mxu0 0.0
    %667 = vmatpush1.msra.mxu0 %v647
    %668 = vmatprep.subr.mxu0 0.0
    %669 = vmatpush1.msra.mxu0 %v648
    %670 = vmatprep.subr.mxu0 0.0
    %671 = vmatpush1.msra.mxu0 %v649
    %672 = vmatprep.subr.mxu0 0.0
    %673 = vmatpush1.msra.mxu0 %v650
    %674 = vmatprep.subr.mxu0 0.0
    %675 = vmatpush1.msra.mxu0 %v651
    %676 = vmatprep.subr.mxu0 0.0
    %677 = vmatpush1.msra.mxu0 %v652
    %678 = vmatprep.subr.mxu0 0.0
    %679 = vmatpush1.msra.mxu0 %v653
    %680 = vmatprep.subr.mxu0 0.0
    %681 = vmatpush1.msra.mxu0 %v654
    %682 = vmatprep.subr.mxu0 0.0
    %683 = vmatpush1.msra.mxu0 %v655
    %684 = vmatprep.subr.mxu0 0.0
    %685 = vmatpush1.msra.mxu0 %v656
    %686 = vmatprep.subr.mxu0 0.0
    %687 = vmatpush1.msra.mxu0 %v657
    %688 = vmatprep.subr.mxu0 0.0
    %689 = vmatpush1.msra.mxu0 %v658
    %690 = vmatprep.subr.mxu0 0.0
    %691 = vmatpush1.msra.mxu0 %v659
    %692 = vmatprep.subr.mxu0 0.0
    %693 = vmatpush1.msra.mxu0 0.0
    %694 = vmatprep.subr.mxu0 0.0
    %695 = vmatpush1.msra.mxu0 0.0
    %696 = vmatprep.subr.mxu0 0.0
    %697 = vmatpush1.msra.mxu0 0.0
    %698 = vmatprep.subr.mxu0 0.0
    %699 = vmatpush1.msra.mxu0 0.0
    %700 = vmatprep.subr.mxu0 0.0
    %701 = vmatpush1.msra.mxu0 0.0
    %702 = vmatprep.subr.mxu0 0.0
    %703 = vmatpush1.msra.mxu0 0.0
    %704 = vmatprep.subr.mxu0 0.0
    %705 = vmatpush1.msra.mxu0 0.0
    %706 = vmatprep.subr.mxu0 0.0
    %707 = vmatpush1.msra.mxu0 0.0
    %708 = vmatprep.subr.mxu0 0.0
    %709 = vmatpush1.msra.mxu0 0.0
    %710 = vmatprep.subr.mxu0 0.0
    %711 = vmatpush1.msra.mxu0 0.0
    %712 = vmatprep.subr.mxu0 0.0
    %713 = vmatpush1.msra.mxu0 0.0
    %714 = vmatprep.subr.mxu0 0.0
    %715 = vmatpush1.msra.mxu0 0.0
    %716 = vmatprep.subr.mxu0 0.0
    %717 = vmatpush1.msra.mxu0 0.0
    %718 = vmatprep.subr.mxu0 0.0
    %719 = vmatpush1.msra.mxu0 0.0
    %720 = vmatprep.subr.mxu0 0.0
    %721 = vmatpush1.msra.mxu0 0.0
    %722 = vmatprep.subr.mxu0 0.0
    %723 = vmatpush1.msra.mxu0 0.0
    %724 = vmatprep.mubr.f32.mxu0 0.0
    %725 = vmatmul.mubr.f32.gmra.mrb[0].mxu0 %v610
    %v726 = vpop.f32.mrb[0].mxu0
    %v727 = vadd.f32 0.0, %v726
    %v728 = vpop.f32.mrb[0].mxu0
    %729 = vmatprep.mubr.f32.mxu0 0.0
    %730 = vmatmul.mubr.f32.gmra.mrb[0].mxu0 %v611
    %v731 = vpop.f32.mrb[0].mxu0
    %v732 = vadd.f32 0.0, %v731
    %v733 = vpop.f32.mrb[0].mxu0
    %734 = vmatprep.mubr.f32.mxu0 0.0
    %735 = vmatmul.mubr.f32.gmra.mrb[0].mxu0 %v612
    %v736 = vpop.f32.mrb[0].mxu0
    %v737 = vadd.f32 0.0, %v736
    %v738 = vpop.f32.mrb[0].mxu0
    %739 = vmatprep.mubr.f32.mxu0 0.0
    %740 = vmatmul.mubr.f32.gmra.mrb[0].mxu0 %v613
    %v741 = vpop.f32.mrb[0].mxu0
    %v742 = vadd.f32 0.0, %v741
    %v743 = vpop.f32.mrb[0].mxu0
    %744 = vmatprep.mubr.f32.mxu0 0.0
    %745 = vmatmul.mubr.f32.gmra.mrb[0].mxu0 %v614
    %v746 = vpop.f32.mrb[0].mxu0
    %v747 = vadd.f32 0.0, %v746
    %v748 = vpop.f32.mrb[0].mxu0
    %749 = vmatprep.mubr.f32.mxu0 0.0
    %750 = vmatmul.mubr.f32.gmra.mrb[0].mxu0 %v615
    %v751 = vpop.f32.mrb[0].mxu0
    %v752 = vadd.f32 0.0, %v751
    %v753 = vpop.f32.mrb[0].mxu0
    %754 = vmatprep.mubr.f32.mxu0 0.0
    %755 = vmatmul.mubr.f32.gmra.mrb[0].mxu0 %v616
    %v756 = vpop.f32.mrb[0].mxu0
    %v757 = vadd.f32 0.0, %v756
    %v758 = vpop.f32.mrb[0].mxu0
    %759 = vmatprep.mubr.f32.mxu0 0.0
    %760 = vmatmul.mubr.f32.gmra.mrb[0].mxu0 %v617
    %v761 = vpop.f32.mrb[0].mxu0
    %v762 = vadd.f32 0.0, %v761
    %v763 = vpop.f32.mrb[0].mxu0
    %764 = vmatprep.mubr.f32.mxu0 0.0
    %765 = vmatmul.mubr.f32.gmra.mrb[0].mxu0 %v618
    %v766 = vpop.f32.mrb[0].mxu0
    %v767 = vadd.f32 0.0, %v766
    %v768 = vpop.f32.mrb[0].mxu0
    %769 = vmatprep.mubr.f32.mxu0 0.0
    %770 = vmatmul.mubr.f32.gmra.mrb[0].mxu0 %v619
    %v771 = vpop.f32.mrb[0].mxu0
    %v772 = vadd.f32 0.0, %v771
    %v773 = vpop.f32.mrb[0].mxu0
    %774 = vmatprep.mubr.f32.mxu0 0.0
    %775 = vmatmul.mubr.f32.gmra.mrb[0].mxu0 %v620
    %v776 = vpop.f32.mrb[0].mxu0
    %v777 = vadd.f32 0.0, %v776
    %v778 = vpop.f32.mrb[0].mxu0
    %779 = vmatprep.mubr.f32.mxu0 0.0
    %780 = vmatmul.mubr.f32.gmra.mrb[0].mxu0 %v621
    %v781 = vpop.f32.mrb[0].mxu0
    %v782 = vadd.f32 0.0, %v781
    %v783 = vpop.f32.mrb[0].mxu0
    %784 = vmatprep.mubr.f32.mxu0 0.0
    %785 = vmatmul.mubr.f32.gmra.mrb[0].mxu0 %v622
    %v786 = vpop.f32.mrb[0].mxu0
    %v787 = vadd.f32 0.0, %v786
    %v788 = vpop.f32.mrb[0].mxu0
    %789 = vmatprep.mubr.f32.mxu0 0.0
    %790 = vmatmul.mubr.f32.gmra.mrb[0].mxu0 %v623
    %v791 = vpop.f32.mrb[0].mxu0
    %v792 = vadd.f32 0.0, %v791
    %v793 = vpop.f32.mrb[0].mxu0
    %794 = vmatprep.mubr.f32.mxu0 0.0
    %795 = vmatmul.mubr.f32.gmra.mrb[0].mxu0 %v624
    %v796 = vpop.f32.mrb[0].mxu0
    %v797 = vadd.f32 0.0, %v796
    %v798 = vpop.f32.mrb[0].mxu0
    %799 = vmatprep.mubr.f32.mxu0 0.0
    %800 = vmatmul.mubr.f32.gmra.mrb[0].mxu0 %v625
    %v801 = vpop.f32.mrb[0].mxu0
    %v802 = vadd.f32 0.0, %v801
    %v803 = vpop.f32.mrb[0].mxu0
    %804 = vmatprep.mubr.f32.mxu0 0.0
    %805 = vmatmul.mubr.f32.gmra.mrb[0].mxu0 %v626
    %v806 = vpop.f32.mrb[0].mxu0
    %v807 = vadd.f32 0.0, %v806
    %v808 = vpop.f32.mrb[0].mxu0
    %809 = vmatprep.mubr.f32.mxu0 0.0
    %810 = vmatmul.mubr.f32.gmra.mrb[0].mxu0 %v627
    %v811 = vpop.f32.mrb[0].mxu0
    %v812 = vadd.f32 0.0, %v811
    %v813 = vpop.f32.mrb[0].mxu0
    %814 = vmatprep.mubr.f32.mxu0 0.0
    %815 = vmatmul.mubr.f32.gmra.mrb[0].mxu0 %v628
    %v816 = vpop.f32.mrb[0].mxu0
    %v817 = vadd.f32 0.0, %v816
    %v818 = vpop.f32.mrb[0].mxu0
    %819 = vmatprep.mubr.f32.mxu0 0.0
    %820 = vmatmul.mubr.f32.gmra.mrb[0].mxu0 %v629
    %v821 = vpop.f32.mrb[0].mxu0
    %v822 = vadd.f32 0.0, %v821
    %v823 = vpop.f32.mrb[0].mxu0
    %824 = vmatprep.mubr.f32.mxu0 0.0
    %825 = vmatmul.mubr.f32.gmra.mrb[0].mxu0 %v630
    %v826 = vpop.f32.mrb[0].mxu0
    %v827 = vadd.f32 0.0, %v826
    %v828 = vpop.f32.mrb[0].mxu0
    %829 = vmatprep.mubr.f32.mxu0 0.0
    %830 = vmatmul.mubr.f32.gmra.mrb[0].mxu0 %v631
    %v831 = vpop.f32.mrb[0].mxu0
    %v832 = vadd.f32 0.0, %v831
    %v833 = vpop.f32.mrb[0].mxu0
    %834 = vmatprep.mubr.f32.mxu0 0.0
    %835 = vmatmul.mubr.f32.gmra.mrb[0].mxu0 %v632
    %v836 = vpop.f32.mrb[0].mxu0
    %v837 = vadd.f32 0.0, %v836
    %v838 = vpop.f32.mrb[0].mxu0
    %839 = vmatprep.mubr.f32.mxu0 0.0
    %840 = vmatmul.mubr.f32.gmra.mrb[0].mxu0 %v633
    %v841 = vpop.f32.mrb[0].mxu0
    %v842 = vadd.f32 0.0, %v841
    %v843 = vpop.f32.mrb[0].mxu0
    %844 = vmatprep.mubr.f32.mxu0 0.0
    %845 = vmatmul.mubr.f32.gmra.mrb[0].mxu0 %v634
    %v846 = vpop.f32.mrb[0].mxu0
    %v847 = vadd.f32 0.0, %v846
    %v848 = vpop.f32.mrb[0].mxu0
    %849 = vmatprep.mubr.f32.mxu0 0.0
    %850 = vmatmul.mubr.f32.gmra.mrb[0].mxu0 %v635
    %v851 = vpop.f32.mrb[0].mxu0
    %v852 = vadd.f32 0.0, %v851
    %v853 = vpop.f32.mrb[0].mxu0
    %854 = vmatprep.mubr.f32.mxu0 0.0
    %855 = vmatmul.mubr.f32.gmra.mrb[0].mxu0 %v636
    %v856 = vpop.f32.mrb[0].mxu0
    %v857 = vadd.f32 0.0, %v856
    %v858 = vpop.f32.mrb[0].mxu0
    %859 = vmatprep.mubr.f32.mxu0 0.0
    %860 = vmatmul.mubr.f32.gmra.mrb[0].mxu0 %v637
    %v861 = vpop.f32.mrb[0].mxu0
    %v862 = vadd.f32 0.0, %v861
    %v863 = vpop.f32.mrb[0].mxu0
    %864 = vmatprep.mubr.f32.mxu0 0.0
    %865 = vmatmul.mubr.f32.gmra.mrb[0].mxu0 %v638
    %v866 = vpop.f32.mrb[0].mxu0
    %v867 = vadd.f32 0.0, %v866
    %v868 = vpop.f32.mrb[0].mxu0
    %869 = vmatprep.mubr.f32.mxu0 0.0
    %870 = vmatmul.mubr.f32.gmra.mrb[0].mxu0 %v639
    %v871 = vpop.f32.mrb[0].mxu0
    %v872 = vadd.f32 0.0, %v871
    %v873 = vpop.f32.mrb[0].mxu0
    %874 = vmatprep.mubr.f32.mxu0 0.0
    %875 = vmatmul.mubr.f32.gmra.mrb[0].mxu0 %v640
    %v876 = vpop.f32.mrb[0].mxu0
    %v877 = vadd.f32 0.0, %v876
    %v878 = vpop.f32.mrb[0].mxu0
    %879 = vmatprep.mubr.f32.mxu0 0.0
    %880 = vmatmul.mubr.f32.gmra.mrb[0].mxu0 %v641
    %v881 = vpop.f32.mrb[0].mxu0
    %v882 = vadd.f32 0.0, %v881
    %v883 = vpop.f32.mrb[0].mxu0
    %884 = vdwg.mxu0
    %v885 = vmul.f32 %v727, %v727
    %v886 = vmul.f32 %v732, %v732
    %v887 = vmul.f32 %v737, %v737
    %v888 = vmul.f32 %v742, %v742
    %v889 = vmul.f32 %v747, %v747
    %v890 = vmul.f32 %v752, %v752
    %v891 = vmul.f32 %v757, %v757
    %v892 = vmul.f32 %v762, %v762
    %v893 = vmul.f32 %v767, %v767
    %v894 = vmul.f32 %v772, %v772
    %v895 = vmul.f32 %v777, %v777
    %v896 = vmul.f32 %v782, %v782
    %v897 = vmul.f32 %v787, %v787
    %v898 = vmul.f32 %v792, %v792
    %v899 = vmul.f32 %v797, %v797
    %v900 = vmul.f32 %v802, %v802
    %v901 = vmul.f32 %v807, %v807
    %v902 = vmul.f32 %v812, %v812
    %v903 = vmul.f32 %v817, %v817
    %v904 = vmul.f32 %v822, %v822
    %v905 = vmul.f32 %v827, %v827
    %v906 = vmul.f32 %v832, %v832
    %v907 = vmul.f32 %v837, %v837
    %v908 = vmul.f32 %v842, %v842
    %v909 = vmul.f32 %v847, %v847
    %v910 = vmul.f32 %v852, %v852
    %v911 = vmul.f32 %v857, %v857
    %v912 = vmul.f32 %v862, %v862
    %v913 = vmul.f32 %v867, %v867
    %v914 = vmul.f32 %v872, %v872
    %v915 = vmul.f32 %v877, %v877
    %v916 = vmul.f32 %v882, %v882
    %v917 = vadd.f32 %v727, %v732
    %v918 = vadd.f32 %v917, %v737
    %v919 = vadd.f32 %v918, %v742
    %v920 = vadd.f32 %v919, %v747
    %v921 = vadd.f32 %v920, %v752
    %v922 = vadd.f32 %v921, %v757
    %v923 = vadd.f32 %v922, %v762
    %v924 = vadd.f32 %v923, %v767
    %v925 = vadd.f32 %v924, %v772
    %v926 = vadd.f32 %v925, %v777
    %v927 = vadd.f32 %v926, %v782
    %v928 = vadd.f32 %v927, %v787
    %v929 = vadd.f32 %v928, %v792
    %v930 = vadd.f32 %v929, %v797
    %v931 = vadd.f32 %v930, %v802
    %v932 = vadd.f32 %v931, %v807
    %v933 = vadd.f32 %v932, %v812
    %v934 = vadd.f32 %v933, %v817
    %v935 = vadd.f32 %v934, %v822
    %v936 = vadd.f32 %v935, %v827
    %v937 = vadd.f32 %v936, %v832
    %v938 = vadd.f32 %v937, %v837
    %v939 = vadd.f32 %v938, %v842
    %v940 = vadd.f32 %v939, %v847
    %v941 = vadd.f32 %v940, %v852
    %v942 = vadd.f32 %v941, %v857
    %v943 = vadd.f32 %v942, %v862
    %v944 = vadd.f32 %v943, %v867
    %v945 = vadd.f32 %v944, %v872
    %v946 = vadd.f32 %v945, %v877
    %v947 = vadd.f32 %v946, %v882
    %v948 = vrot.slane %v947, 4
    %v949 = vadd.f32 %v947, %v948
    %v950 = vrot.slane %v949, 2
    %v951 = vadd.f32 %v949, %v950
    %v952 = vrot.slane %v951, 1
    %v953 = vadd.f32 %v951, %v952
    %v954 = vadd.f32 %v885, %v886
    %v955 = vadd.f32 %v954, %v887
    %v956 = vadd.f32 %v955, %v888
    %v957 = vadd.f32 %v956, %v889
    %v958 = vadd.f32 %v957, %v890
    %v959 = vadd.f32 %v958, %v891
    %v960 = vadd.f32 %v959, %v892
    %v961 = vadd.f32 %v960, %v893
    %v962 = vadd.f32 %v961, %v894
    %v963 = vadd.f32 %v962, %v895
    %v964 = vadd.f32 %v963, %v896
    %v965 = vadd.f32 %v964, %v897
    %v966 = vadd.f32 %v965, %v898
    %v967 = vadd.f32 %v966, %v899
    %v968 = vadd.f32 %v967, %v900
    %v969 = vadd.f32 %v968, %v901
    %v970 = vadd.f32 %v969, %v902
    %v971 = vadd.f32 %v970, %v903
    %v972 = vadd.f32 %v971, %v904
    %v973 = vadd.f32 %v972, %v905
    %v974 = vadd.f32 %v973, %v906
    %v975 = vadd.f32 %v974, %v907
    %v976 = vadd.f32 %v975, %v908
    %v977 = vadd.f32 %v976, %v909
    %v978 = vadd.f32 %v977, %v910
    %v979 = vadd.f32 %v978, %v911
    %v980 = vadd.f32 %v979, %v912
    %v981 = vadd.f32 %v980, %v913
    %v982 = vadd.f32 %v981, %v914
    %v983 = vadd.f32 %v982, %v915
    %v984 = vadd.f32 %v983, %v916
    %v985 = vrot.slane %v984, 4
    %v986 = vadd.f32 %v984, %v985
    %v987 = vrot.slane %v986, 2
    %v988 = vadd.f32 %v986, %v987
    %v989 = vrot.slane %v988, 1
    %v990 = vadd.f32 %v988, %v989
    %v991 = vmul.f32 %v953, 0.00390625
    %v992 = vmul.f32 %v990, 0.00390625
    %v993 = vmul.f32 %v991, %v991
    %v994 = vsub.f32 %v992, %v993
    %v995 = vadd.f32 %v994, 1e-05
    %v996 = vrsqrt.pop %v995
    %v997 = vmul.f32 %v642, %v996
    %v998 = vmul.f32 %v991, %v997
    %v999 = vsub.f32 %v643, %v998
    %v1000 = vmul.f32 %v727, %v997
    %v1001 = vmul.f32 %v732, %v997
    %v1002 = vmul.f32 %v737, %v997
    %v1003 = vmul.f32 %v742, %v997
    %v1004 = vmul.f32 %v747, %v997
    %v1005 = vmul.f32 %v752, %v997
    %v1006 = vmul.f32 %v757, %v997
    %v1007 = vmul.f32 %v762, %v997
    %v1008 = vmul.f32 %v767, %v997
    %v1009 = vmul.f32 %v772, %v997
    %v1010 = vmul.f32 %v777, %v997
    %v1011 = vmul.f32 %v782, %v997
    %v1012 = vmul.f32 %v787, %v997
    %v1013 = vmul.f32 %v792, %v997
    %v1014 = vmul.f32 %v797, %v997
    %v1015 = vmul.f32 %v802, %v997
    %v1016 = vmul.f32 %v807, %v997
    %v1017 = vmul.f32 %v812, %v997
    %v1018 = vmul.f32 %v817, %v997
    %v1019 = vmul.f32 %v822, %v997
    %v1020 = vmul.f32 %v827, %v997
    %v1021 = vmul.f32 %v832, %v997
    %v1022 = vmul.f32 %v837, %v997
    %v1023 = vmul.f32 %v842, %v997
    %v1024 = vmul.f32 %v847, %v997
    %v1025 = vmul.f32 %v852, %v997
    %v1026 = vmul.f32 %v857, %v997
    %v1027 = vmul.f32 %v862, %v997
    %v1028 = vmul.f32 %v867, %v997
    %v1029 = vmul.f32 %v872, %v997
    %v1030 = vmul.f32 %v877, %v997
    %v1031 = vmul.f32 %v882, %v997
    %v1032 = vadd.f32 %v1000, %v999
    %v1033 = vadd.f32 %v1001, %v999
    %v1034 = vadd.f32 %v1002, %v999
    %v1035 = vadd.f32 %v1003, %v999
    %v1036 = vadd.f32 %v1004, %v999
    %v1037 = vadd.f32 %v1005, %v999
    %v1038 = vadd.f32 %v1006, %v999
    %v1039 = vadd.f32 %v1007, %v999
    %v1040 = vadd.f32 %v1008, %v999
    %v1041 = vadd.f32 %v1009, %v999
    %v1042 = vadd.f32 %v1010, %v999
    %v1043 = vadd.f32 %v1011, %v999
    %v1044 = vadd.f32 %v1012, %v999
    %v1045 = vadd.f32 %v1013, %v999
    %v1046 = vadd.f32 %v1014, %v999
    %v1047 = vadd.f32 %v1015, %v999
    %v1048 = vadd.f32 %v1016, %v999
    %v1049 = vadd.f32 %v1017, %v999
    %v1050 = vadd.f32 %v1018, %v999
    %v1051 = vadd.f32 %v1019, %v999
    %v1052 = vadd.f32 %v1020, %v999
    %v1053 = vadd.f32 %v1021, %v999
    %v1054 = vadd.f32 %v1022, %v999
    %v1055 = vadd.f32 %v1023, %v999
    %v1056 = vadd.f32 %v1024, %v999
    %v1057 = vadd.f32 %v1025, %v999
    %v1058 = vadd.f32 %v1026, %v999
    %v1059 = vadd.f32 %v1027, %v999
    %v1060 = vadd.f32 %v1028, %v999
    %v1061 = vadd.f32 %v1029, %v999
    %v1062 = vadd.f32 %v1030, %v999
    %v1063 = vadd.f32 %v1031, %v999
    %v1064 = vmax.f32 %v1032, 0.0
    %v1065 = vmax.f32 %v1033, 0.0
    %v1066 = vmax.f32 %v1034, 0.0
    %v1067 = vmax.f32 %v1035, 0.0
    %v1068 = vmax.f32 %v1036, 0.0
    %v1069 = vmax.f32 %v1037, 0.0
    %v1070 = vmax.f32 %v1038, 0.0
    %v1071 = vmax.f32 %v1039, 0.0
    %v1072 = vmax.f32 %v1040, 0.0
    %v1073 = vmax.f32 %v1041, 0.0
    %v1074 = vmax.f32 %v1042, 0.0
    %v1075 = vmax.f32 %v1043, 0.0
    %v1076 = vmax.f32 %v1044, 0.0
    %v1077 = vmax.f32 %v1045, 0.0
    %v1078 = vmax.f32 %v1046, 0.0
    %v1079 = vmax.f32 %v1047, 0.0
    %v1080 = vmax.f32 %v1048, 0.0
    %v1081 = vmax.f32 %v1049, 0.0
    %v1082 = vmax.f32 %v1050, 0.0
    %v1083 = vmax.f32 %v1051, 0.0
    %v1084 = vmax.f32 %v1052, 0.0
    %v1085 = vmax.f32 %v1053, 0.0
    %v1086 = vmax.f32 %v1054, 0.0
    %v1087 = vmax.f32 %v1055, 0.0
    %v1088 = vmax.f32 %v1056, 0.0
    %v1089 = vmax.f32 %v1057, 0.0
    %v1090 = vmax.f32 %v1058, 0.0
    %v1091 = vmax.f32 %v1059, 0.0
    %v1092 = vmax.f32 %v1060, 0.0
    %v1093 = vmax.f32 %v1061, 0.0
    %v1094 = vmax.f32 %v1062, 0.0
    %v1095 = vmax.f32 %v1063, 0.0
    %s1096 = scalar_lea.vmem %s5, 4
    %v1097 = vld [vmem:[%s1096] ss:$8 sm:$0x3]
    %s1098 = scalar_lea.vmem %s5, 5
    %v1099 = vld [vmem:[%s1098] ss:$8 sm:$0x3]
    %v1100 = vld [vmem:[#allocation7] sm:$0xff]
    %v1101 = vld [vmem:[#allocation7 + $0x8] sm:$0xff]
    %v1102 = vld [vmem:[#allocation7 + $0x10] sm:$0xff]
    %v1103 = vld [vmem:[#allocation7 + $0x18] sm:$0xff]
    %v1104 = vld [vmem:[#allocation7 + $0x20] sm:$0xff]
    %v1105 = vld [vmem:[#allocation7 + $0x28] sm:$0xff]
    %v1106 = vld [vmem:[#allocation7 + $0x30] sm:$0xff]
    %v1107 = vld [vmem:[#allocation7 + $0x38] sm:$0xff]
    %v1108 = vld [vmem:[#allocation7 + $0x40] sm:$0xff]
    %v1109 = vld [vmem:[#allocation7 + $0x48] sm:$0xff]
    %v1110 = vld [vmem:[#allocation7 + $0x50] sm:$0xff]
    %v1111 = vld [vmem:[#allocation7 + $0x58] sm:$0xff]
    %v1112 = vld [vmem:[#allocation7 + $0x60] sm:$0xff]
    %v1113 = vld [vmem:[#allocation7 + $0x68] sm:$0xff]
    %v1114 = vld [vmem:[#allocation7 + $0x70] sm:$0xff]
    %v1115 = vld [vmem:[#allocation7 + $0x78] sm:$0xff]
    %v1116 = vld [vmem:[#allocation7 + $0x80] sm:$0xff]
    %v1117 = vld [vmem:[#allocation7 + $0x88] sm:$0xff]
    %v1118 = vld [vmem:[#allocation7 + $0x90] sm:$0xff]
    %v1119 = vld [vmem:[#allocation7 + $0x98] sm:$0xff]
    %v1120 = vld [vmem:[#allocation7 + $0xa0] sm:$0xff]
    %v1121 = vld [vmem:[#allocation7 + $0xa8] sm:$0xff]
    %v1122 = vld [vmem:[#allocation7 + $0xb0] sm:$0xff]
    %v1123 = vld [vmem:[#allocation7 + $0xb8] sm:$0xff]
    %v1124 = vld [vmem:[#allocation7 + $0xc0] sm:$0xff]
    %v1125 = vld [vmem:[#allocation7 + $0xc8] sm:$0xff]
    %v1126 = vld [vmem:[#allocation7 + $0xd0] sm:$0xff]
    %v1127 = vld [vmem:[#allocation7 + $0xd8] sm:$0xff]
    %v1128 = vld [vmem:[#allocation7 + $0xe0] sm:$0xff]
    %v1129 = vld [vmem:[#allocation7 + $0xe8] sm:$0xff]
    %v1130 = vld [vmem:[#allocation7 + $0xf0] sm:$0xff]
    %v1131 = vld [vmem:[#allocation7 + $0xf8] sm:$0xff]
    %1132 = vmatprep.subr.mxu0 %v1101
    %1133 = vmatpush1.msra.mxu0 %v1100
    %1134 = vmatprep.subr.mxu0 %v1103
    %1135 = vmatpush1.msra.mxu0 %v1102
    %1136 = vmatprep.subr.mxu0 %v1105
    %1137 = vmatpush1.msra.mxu0 %v1104
    %1138 = vmatprep.subr.mxu0 %v1107
    %1139 = vmatpush1.msra.mxu0 %v1106
    %1140 = vmatprep.subr.mxu0 %v1109
    %1141 = vmatpush1.msra.mxu0 %v1108
    %1142 = vmatprep.subr.mxu0 %v1111
    %1143 = vmatpush1.msra.mxu0 %v1110
    %1144 = vmatprep.subr.mxu0 %v1113
    %1145 = vmatpush1.msra.mxu0 %v1112
    %1146 = vmatprep.subr.mxu0 %v1115
    %1147 = vmatpush1.msra.mxu0 %v1114
    %1148 = vmatprep.subr.mxu0 %v1117
    %1149 = vmatpush1.msra.mxu0 %v1116
    %1150 = vmatprep.subr.mxu0 %v1119
    %1151 = vmatpush1.msra.mxu0 %v1118
    %1152 = vmatprep.subr.mxu0 %v1121
    %1153 = vmatpush1.msra.mxu0 %v1120
    %1154 = vmatprep.subr.mxu0 %v1123
    %1155 = vmatpush1.msra.mxu0 %v1122
    %1156 = vmatprep.subr.mxu0 %v1125
    %1157 = vmatpush1.msra.mxu0 %v1124
    %1158 = vmatprep.subr.mxu0 %v1127
    %1159 = vmatpush1.msra.mxu0 %v1126
    %1160 = vmatprep.subr.mxu0 %v1129
    %1161 = vmatpush1.msra.mxu0 %v1128
    %1162 = vmatprep.subr.mxu0 %v1131
    %1163 = vmatpush1.msra.mxu0 %v1130
    %1164 = vmatprep.subr.mxu0 0.0
    %1165 = vmatpush1.msra.mxu0 0.0
    %1166 = vmatprep.subr.mxu0 0.0
    %1167 = vmatpush1.msra.mxu0 0.0
    %1168 = vmatprep.subr.mxu0 0.0
    %1169 = vmatpush1.msra.mxu0 0.0
    %1170 = vmatprep.subr.mxu0 0.0
    %1171 = vmatpush1.msra.mxu0 0.0
    %1172 = vmatprep.subr.mxu0 0.0
    %1173 = vmatpush1.msra.mxu0 0.0
    %1174 = vmatprep.subr.mxu0 0.0
    %1175 = vmatpush1.msra.mxu0 0.0
    %1176 = vmatprep.subr.mxu0 0.0
    %1177 = vmatpush1.msra.mxu0 0.0
    %1178 = vmatprep.subr.mxu0 0.0
    %1179 = vmatpush1.msra.mxu0 0.0
    %1180 = vmatprep.subr.mxu0 0.0
    %1181 = vmatpush1.msra.mxu0 0.0
    %1182 = vmatprep.subr.mxu0 0.0
    %1183 = vmatpush1.msra.mxu0 0.0
    %1184 = vmatprep.subr.mxu0 0.0
    %1185 = vmatpush1.msra.mxu0 0.0
    %1186 = vmatprep.subr.mxu0 0.0
    %1187 = vmatpush1.msra.mxu0 0.0
    %1188 = vmatprep.subr.mxu0 0.0
    %1189 = vmatpush1.msra.mxu0 0.0
    %1190 = vmatprep.subr.mxu0 0.0
    %1191 = vmatpush1.msra.mxu0 0.0
    %1192 = vmatprep.subr.mxu0 0.0
    %1193 = vmatpush1.msra.mxu0 0.0
    %1194 = vmatprep.subr.mxu0 0.0
    %1195 = vmatpush1.msra.mxu0 0.0
    %1196 = vmatprep.mubr.f32.mxu0 0.0
    %1197 = vmatmul.mubr.f32.gmra.mrb[0].mxu0 %v1064
    %v1198 = vpop.f32.mrb[0].mxu0
    %v1199 = vadd.f32 0.0, %v1198
    %v1200 = vpop.f32.mrb[0].mxu0
    %v1201 = vadd.f32 0.0, %v1200
    %1202 = vmatprep.mubr.f32.mxu0 0.0
    %1203 = vmatmul.mubr.f32.gmra.mrb[0].mxu0 %v1065
    %v1204 = vpop.f32.mrb[0].mxu0
    %v1205 = vadd.f32 0.0, %v1204
    %v1206 = vpop.f32.mrb[0].mxu0
    %v1207 = vadd.f32 0.0, %v1206
    %1208 = vmatprep.mubr.f32.mxu0 0.0
    %1209 = vmatmul.mubr.f32.gmra.mrb[0].mxu0 %v1066
    %v1210 = vpop.f32.mrb[0].mxu0
    %v1211 = vadd.f32 0.0, %v1210
    %v1212 = vpop.f32.mrb[0].mxu0
    %v1213 = vadd.f32 0.0, %v1212
    %1214 = vmatprep.mubr.f32.mxu0 0.0
    %1215 = vmatmul.mubr.f32.gmra.mrb[0].mxu0 %v1067
    %v1216 = vpop.f32.mrb[0].mxu0
    %v1217 = vadd.f32 0.0, %v1216
    %v1218 = vpop.f32.mrb[0].mxu0
    %v1219 = vadd.f32 0.0, %v1218
    %1220 = vmatprep.mubr.f32.mxu0 0.0
    %1221 = vmatmul.mubr.f32.gmra.mrb[0].mxu0 %v1068
    %v1222 = vpop.f32.mrb[0].mxu0
    %v1223 = vadd.f32 0.0, %v1222
    %v1224 = vpop.f32.mrb[0].mxu0
    %v1225 = vadd.f32 0.0, %v1224
    %1226 = vmatprep.mubr.f32.mxu0 0.0
    %1227 = vmatmul.mubr.f32.gmra.mrb[0].mxu0 %v1069
    %v1228 = vpop.f32.mrb[0].mxu0
    %v1229 = vadd.f32 0.0, %v1228
    %v1230 = vpop.f32.mrb[0].mxu0
    %v1231 = vadd.f32 0.0, %v1230
    %1232 = vmatprep.mubr.f32.mxu0 0.0
    %1233 = vmatmul.mubr.f32.gmra.mrb[0].mxu0 %v1070
    %v1234 = vpop.f32.mrb[0].mxu0
    %v1235 = vadd.f32 0.0, %v1234
    %v1236 = vpop.f32.mrb[0].mxu0
    %v1237 = vadd.f32 0.0, %v1236
    %1238 = vmatprep.mubr.f32.mxu0 0.0
    %1239 = vmatmul.mubr.f32.gmra.mrb[0].mxu0 %v1071
    %v1240 = vpop.f32.mrb[0].mxu0
    %v1241 = vadd.f32 0.0, %v1240
    %v1242 = vpop.f32.mrb[0].mxu0
    %v1243 = vadd.f32 0.0, %v1242
    %1244 = vmatprep.mubr.f32.mxu0 0.0
    %1245 = vmatmul.mubr.f32.gmra.mrb[0].mxu0 %v1072
    %v1246 = vpop.f32.mrb[0].mxu0
    %v1247 = vadd.f32 0.0, %v1246
    %v1248 = vpop.f32.mrb[0].mxu0
    %v1249 = vadd.f32 0.0, %v1248
    %1250 = vmatprep.mubr.f32.mxu0 0.0
    %1251 = vmatmul.mubr.f32.gmra.mrb[0].mxu0 %v1073
    %v1252 = vpop.f32.mrb[0].mxu0
    %v1253 = vadd.f32 0.0, %v1252
    %v1254 = vpop.f32.mrb[0].mxu0
    %v1255 = vadd.f32 0.0, %v1254
    %1256 = vmatprep.mubr.f32.mxu0 0.0
    %1257 = vmatmul.mubr.f32.gmra.mrb[0].mxu0 %v1074
    %v1258 = vpop.f32.mrb[0].mxu0
    %v1259 = vadd.f32 0.0, %v1258
    %v1260 = vpop.f32.mrb[0].mxu0
    %v1261 = vadd.f32 0.0, %v1260
    %1262 = vmatprep.mubr.f32.mxu0 0.0
    %1263 = vmatmul.mubr.f32.gmra.mrb[0].mxu0 %v1075
    %v1264 = vpop.f32.mrb[0].mxu0
    %v1265 = vadd.f32 0.0, %v1264
    %v1266 = vpop.f32.mrb[0].mxu0
    %v1267 = vadd.f32 0.0, %v1266
    %1268 = vmatprep.mubr.f32.mxu0 0.0
    %1269 = vmatmul.mubr.f32.gmra.mrb[0].mxu0 %v1076
    %v1270 = vpop.f32.mrb[0].mxu0
    %v1271 = vadd.f32 0.0, %v1270
    %v1272 = vpop.f32.mrb[0].mxu0
    %v1273 = vadd.f32 0.0, %v1272
    %1274 = vmatprep.mubr.f32.mxu0 0.0
    %1275 = vmatmul.mubr.f32.gmra.mrb[0].mxu0 %v1077
    %v1276 = vpop.f32.mrb[0].mxu0
    %v1277 = vadd.f32 0.0, %v1276
    %v1278 = vpop.f32.mrb[0].mxu0
    %v1279 = vadd.f32 0.0, %v1278
    %1280 = vmatprep.mubr.f32.mxu0 0.0
    %1281 = vmatmul.mubr.f32.gmra.mrb[0].mxu0 %v1078
    %v1282 = vpop.f32.mrb[0].mxu0
    %v1283 = vadd.f32 0.0, %v1282
    %v1284 = vpop.f32.mrb[0].mxu0
    %v1285 = vadd.f32 0.0, %v1284
    %1286 = vmatprep.mubr.f32.mxu0 0.0
    %1287 = vmatmul.mubr.f32.gmra.mrb[0].mxu0 %v1079
    %v1288 = vpop.f32.mrb[0].mxu0
    %v1289 = vadd.f32 0.0, %v1288
    %v1290 = vpop.f32.mrb[0].mxu0
    %v1291 = vadd.f32 0.0, %v1290
    %1292 = vmatprep.mubr.f32.mxu0 0.0
    %1293 = vmatmul.mubr.f32.gmra.mrb[0].mxu0 %v1080
    %v1294 = vpop.f32.mrb[0].mxu0
    %v1295 = vadd.f32 0.0, %v1294
    %v1296 = vpop.f32.mrb[0].mxu0
    %v1297 = vadd.f32 0.0, %v1296
    %1298 = vmatprep.mubr.f32.mxu0 0.0
    %1299 = vmatmul.mubr.f32.gmra.mrb[0].mxu0 %v1081
    %v1300 = vpop.f32.mrb[0].mxu0
    %v1301 = vadd.f32 0.0, %v1300
    %v1302 = vpop.f32.mrb[0].mxu0
    %v1303 = vadd.f32 0.0, %v1302
    %1304 = vmatprep.mubr.f32.mxu0 0.0
    %1305 = vmatmul.mubr.f32.gmra.mrb[0].mxu0 %v1082
    %v1306 = vpop.f32.mrb[0].mxu0
    %v1307 = vadd.f32 0.0, %v1306
    %v1308 = vpop.f32.mrb[0].mxu0
    %v1309 = vadd.f32 0.0, %v1308
    %1310 = vmatprep.mubr.f32.mxu0 0.0
    %1311 = vmatmul.mubr.f32.gmra.mrb[0].mxu0 %v1083
    %v1312 = vpop.f32.mrb[0].mxu0
    %v1313 = vadd.f32 0.0, %v1312
    %v1314 = vpop.f32.mrb[0].mxu0
    %v1315 = vadd.f32 0.0, %v1314
    %1316 = vmatprep.mubr.f32.mxu0 0.0
    %1317 = vmatmul.mubr.f32.gmra.mrb[0].mxu0 %v1084
    %v1318 = vpop.f32.mrb[0].mxu0
    %v1319 = vadd.f32 0.0, %v1318
    %v1320 = vpop.f32.mrb[0].mxu0
    %v1321 = vadd.f32 0.0, %v1320
    %1322 = vmatprep.mubr.f32.mxu0 0.0
    %1323 = vmatmul.mubr.f32.gmra.mrb[0].mxu0 %v1085
    %v1324 = vpop.f32.mrb[0].mxu0
    %v1325 = vadd.f32 0.0, %v1324
    %v1326 = vpop.f32.mrb[0].mxu0
    %v1327 = vadd.f32 0.0, %v1326
    %1328 = vmatprep.mubr.f32.mxu0 0.0
    %1329 = vmatmul.mubr.f32.gmra.mrb[0].mxu0 %v1086
    %v1330 = vpop.f32.mrb[0].mxu0
    %v1331 = vadd.f32 0.0, %v1330
    %v1332 = vpop.f32.mrb[0].mxu0
    %v1333 = vadd.f32 0.0, %v1332
    %1334 = vmatprep.mubr.f32.mxu0 0.0
    %1335 = vmatmul.mubr.f32.gmra.mrb[0].mxu0 %v1087
    %v1336 = vpop.f32.mrb[0].mxu0
    %v1337 = vadd.f32 0.0, %v1336
    %v1338 = vpop.f32.mrb[0].mxu0
    %v1339 = vadd.f32 0.0, %v1338
    %1340 = vmatprep.mubr.f32.mxu0 0.0
    %1341 = vmatmul.mubr.f32.gmra.mrb[0].mxu0 %v1088
    %v1342 = vpop.f32.mrb[0].mxu0
    %v1343 = vadd.f32 0.0, %v1342
    %v1344 = vpop.f32.mrb[0].mxu0
    %v1345 = vadd.f32 0.0, %v1344
    %1346 = vmatprep.mubr.f32.mxu0 0.0
    %1347 = vmatmul.mubr.f32.gmra.mrb[0].mxu0 %v1089
    %v1348 = vpop.f32.mrb[0].mxu0
    %v1349 = vadd.f32 0.0, %v1348
    %v1350 = vpop.f32.mrb[0].mxu0
    %v1351 = vadd.f32 0.0, %v1350
    %1352 = vmatprep.mubr.f32.mxu0 0.0
    %1353 = vmatmul.mubr.f32.gmra.mrb[0].mxu0 %v1090
    %v1354 = vpop.f32.mrb[0].mxu0
    %v1355 = vadd.f32 0.0, %v1354
    %v1356 = vpop.f32.mrb[0].mxu0
    %v1357 = vadd.f32 0.0, %v1356
    %1358 = vmatprep.mubr.f32.mxu0 0.0
    %1359 = vmatmul.mubr.f32.gmra.mrb[0].mxu0 %v1091
    %v1360 = vpop.f32.mrb[0].mxu0
    %v1361 = vadd.f32 0.0, %v1360
    %v1362 = vpop.f32.mrb[0].mxu0
    %v1363 = vadd.f32 0.0, %v1362
    %1364 = vmatprep.mubr.f32.mxu0 0.0
    %1365 = vmatmul.mubr.f32.gmra.mrb[0].mxu0 %v1092
    %v1366 = vpop.f32.mrb[0].mxu0
    %v1367 = vadd.f32 0.0, %v1366
    %v1368 = vpop.f32.mrb[0].mxu0
    %v1369 = vadd.f32 0.0, %v1368
    %1370 = vmatprep.mubr.f32.mxu0 0.0
    %1371 = vmatmul.mubr.f32.gmra.mrb[0].mxu0 %v1093
    %v1372 = vpop.f32.mrb[0].mxu0
    %v1373 = vadd.f32 0.0, %v1372
    %v1374 = vpop.f32.mrb[0].mxu0
    %v1375 = vadd.f32 0.0, %v1374
    %1376 = vmatprep.mubr.f32.mxu0 0.0
    %1377 = vmatmul.mubr.f32.gmra.mrb[0].mxu0 %v1094
    %v1378 = vpop.f32.mrb[0].mxu0
    %v1379 = vadd.f32 0.0, %v1378
    %v1380 = vpop.f32.mrb[0].mxu0
    %v1381 = vadd.f32 0.0, %v1380
    %1382 = vmatprep.mubr.f32.mxu0 0.0
    %1383 = vmatmul.mubr.f32.gmra.mrb[0].mxu0 %v1095
    %v1384 = vpop.f32.mrb[0].mxu0
    %v1385 = vadd.f32 0.0, %v1384
    %v1386 = vpop.f32.mrb[0].mxu0
    %v1387 = vadd.f32 0.0, %v1386
    %1388 = vdwg.mxu0
    %v1389 = vmul.f32 %v1199, %v1199
    %v1390 = vmul.f32 %v1201, %v1201
    %v1391 = vmul.f32 %v1205, %v1205
    %v1392 = vmul.f32 %v1207, %v1207
    %v1393 = vmul.f32 %v1211, %v1211
    %v1394 = vmul.f32 %v1213, %v1213
    %v1395 = vmul.f32 %v1217, %v1217
    %v1396 = vmul.f32 %v1219, %v1219
    %v1397 = vmul.f32 %v1223, %v1223
    %v1398 = vmul.f32 %v1225, %v1225
    %v1399 = vmul.f32 %v1229, %v1229
    %v1400 = vmul.f32 %v1231, %v1231
    %v1401 = vmul.f32 %v1235, %v1235
    %v1402 = vmul.f32 %v1237, %v1237
    %v1403 = vmul.f32 %v1241, %v1241
    %v1404 = vmul.f32 %v1243, %v1243
    %v1405 = vmul.f32 %v1247, %v1247
    %v1406 = vmul.f32 %v1249, %v1249
    %v1407 = vmul.f32 %v1253, %v1253
    %v1408 = vmul.f32 %v1255, %v1255
    %v1409 = vmul.f32 %v1259, %v1259
    %v1410 = vmul.f32 %v1261, %v1261
    %v1411 = vmul.f32 %v1265, %v1265
    %v1412 = vmul.f32 %v1267, %v1267
    %v1413 = vmul.f32 %v1271, %v1271
    %v1414 = vmul.f32 %v1273, %v1273
    %v1415 = vmul.f32 %v1277, %v1277
    %v1416 = vmul.f32 %v1279, %v1279
    %v1417 = vmul.f32 %v1283, %v1283
    %v1418 = vmul.f32 %v1285, %v1285
    %v1419 = vmul.f32 %v1289, %v1289
    %v1420 = vmul.f32 %v1291, %v1291
    %v1421 = vmul.f32 %v1295, %v1295
    %v1422 = vmul.f32 %v1297, %v1297
    %v1423 = vmul.f32 %v1301, %v1301
    %v1424 = vmul.f32 %v1303, %v1303
    %v1425 = vmul.f32 %v1307, %v1307
    %v1426 = vmul.f32 %v1309, %v1309
    %v1427 = vmul.f32 %v1313, %v1313
    %v1428 = vmul.f32 %v1315, %v1315
    %v1429 = vmul.f32 %v1319, %v1319
    %v1430 = vmul.f32 %v1321, %v1321
    %v1431 = vmul.f32 %v1325, %v1325
    %v1432 = vmul.f32 %v1327, %v1327
    %v1433 = vmul.f32 %v1331, %v1331
    %v1434 = vmul.f32 %v1333, %v1333
    %v1435 = vmul.f32 %v1337, %v1337
    %v1436 = vmul.f32 %v1339, %v1339
    %v1437 = vmul.f32 %v1343, %v1343
    %v1438 = vmul.f32 %v1345, %v1345
    %v1439 = vmul.f32 %v1349, %v1349
    %v1440 = vmul.f32 %v1351, %v1351
    %v1441 = vmul.f32 %v1355, %v1355
    %v1442 = vmul.f32 %v1357, %v1357
    %v1443 = vmul.f32 %v1361, %v1361
    %v1444 = vmul.f32 %v1363, %v1363
    %v1445 = vmul.f32 %v1367, %v1367
    %v1446 = vmul.f32 %v1369, %v1369
    %v1447 = vmul.f32 %v1373, %v1373
    %v1448 = vmul.f32 %v1375, %v1375
    %v1449 = vmul.f32 %v1379, %v1379
    %v1450 = vmul.f32 %v1381, %v1381
    %v1451 = vmul.f32 %v1385, %v1385
    %v1452 = vmul.f32 %v1387, %v1387
    %v1453 = vadd.f32 %v1199, %v1205
    %v1454 = vadd.f32 %v1453, %v1211
    %v1455 = vadd.f32 %v1454, %v1217
    %v1456 = vadd.f32 %v1455, %v1223
    %v1457 = vadd.f32 %v1456, %v1229
    %v1458 = vadd.f32 %v1457, %v1235
    %v1459 = vadd.f32 %v1458, %v1241
    %v1460 = vadd.f32 %v1459, %v1247
    %v1461 = vadd.f32 %v1460, %v1253
    %v1462 = vadd.f32 %v1461, %v1259
    %v1463 = vadd.f32 %v1462, %v1265
    %v1464 = vadd.f32 %v1463, %v1271
    %v1465 = vadd.f32 %v1464, %v1277
    %v1466 = vadd.f32 %v1465, %v1283
    %v1467 = vadd.f32 %v1466, %v1289
    %v1468 = vadd.f32 %v1467, %v1295
    %v1469 = vadd.f32 %v1468, %v1301
    %v1470 = vadd.f32 %v1469, %v1307
    %v1471 = vadd.f32 %v1470, %v1313
    %v1472 = vadd.f32 %v1471, %v1319
    %v1473 = vadd.f32 %v1472, %v1325
    %v1474 = vadd.f32 %v1473, %v1331
    %v1475 = vadd.f32 %v1474, %v1337
    %v1476 = vadd.f32 %v1475, %v1343
    %v1477 = vadd.f32 %v1476, %v1349
    %v1478 = vadd.f32 %v1477, %v1355
    %v1479 = vadd.f32 %v1478, %v1361
    %v1480 = vadd.f32 %v1479, %v1367
    %v1481 = vadd.f32 %v1480, %v1373
    %v1482 = vadd.f32 %v1481, %v1379
    %v1483 = vadd.f32 %v1482, %v1385
    %v1484 = vrot.slane %v1483, 4
    %v1485 = vadd.f32 %v1483, %v1484
    %v1486 = vrot.slane %v1485, 2
    %v1487 = vadd.f32 %v1485, %v1486
    %v1488 = vrot.slane %v1487, 1
    %v1489 = vadd.f32 %v1487, %v1488
    %v1490 = vadd.f32 %v1201, %v1207
    %v1491 = vadd.f32 %v1490, %v1213
    %v1492 = vadd.f32 %v1491, %v1219
    %v1493 = vadd.f32 %v1492, %v1225
    %v1494 = vadd.f32 %v1493, %v1231
    %v1495 = vadd.f32 %v1494, %v1237
    %v1496 = vadd.f32 %v1495, %v1243
    %v1497 = vadd.f32 %v1496, %v1249
    %v1498 = vadd.f32 %v1497, %v1255
    %v1499 = vadd.f32 %v1498, %v1261
    %v1500 = vadd.f32 %v1499, %v1267
    %v1501 = vadd.f32 %v1500, %v1273
    %v1502 = vadd.f32 %v1501, %v1279
    %v1503 = vadd.f32 %v1502, %v1285
    %v1504 = vadd.f32 %v1503, %v1291
    %v1505 = vadd.f32 %v1504, %v1297
    %v1506 = vadd.f32 %v1505, %v1303
    %v1507 = vadd.f32 %v1506, %v1309
    %v1508 = vadd.f32 %v1507, %v1315
    %v1509 = vadd.f32 %v1508, %v1321
    %v1510 = vadd.f32 %v1509, %v1327
    %v1511 = vadd.f32 %v1510, %v1333
    %v1512 = vadd.f32 %v1511, %v1339
    %v1513 = vadd.f32 %v1512, %v1345
    %v1514 = vadd.f32 %v1513, %v1351
    %v1515 = vadd.f32 %v1514, %v1357
    %v1516 = vadd.f32 %v1515, %v1363
    %v1517 = vadd.f32 %v1516, %v1369
    %v1518 = vadd.f32 %v1517, %v1375
    %v1519 = vadd.f32 %v1518, %v1381
    %v1520 = vadd.f32 %v1519, %v1387
    %v1521 = vrot.slane %v1520, 4
    %v1522 = vadd.f32 %v1520, %v1521
    %v1523 = vrot.slane %v1522, 2
    %v1524 = vadd.f32 %v1522, %v1523
    %v1525 = vrot.slane %v1524, 1
    %v1526 = vadd.f32 %v1524, %v1525
    %v1527 = vadd.f32 %v1389, %v1391
    %v1528 = vadd.f32 %v1527, %v1393
    %v1529 = vadd.f32 %v1528, %v1395
    %v1530 = vadd.f32 %v1529, %v1397
    %v1531 = vadd.f32 %v1530, %v1399
    %v1532 = vadd.f32 %v1531, %v1401
    %v1533 = vadd.f32 %v1532, %v1403
    %v1534 = vadd.f32 %v1533, %v1405
    %v1535 = vadd.f32 %v1534, %v1407
    %v1536 = vadd.f32 %v1535, %v1409
    %v1537 = vadd.f32 %v1536, %v1411
    %v1538 = vadd.f32 %v1537, %v1413
    %v1539 = vadd.f32 %v1538, %v1415
    %v1540 = vadd.f32 %v1539, %v1417
    %v1541 = vadd.f32 %v1540, %v1419
    %v1542 = vadd.f32 %v1541, %v1421
    %v1543 = vadd.f32 %v1542, %v1423
    %v1544 = vadd.f32 %v1543, %v1425
    %v1545 = vadd.f32 %v1544, %v1427
    %v1546 = vadd.f32 %v1545, %v1429
    %v1547 = vadd.f32 %v1546, %v1431
    %v1548 = vadd.f32 %v1547, %v1433
    %v1549 = vadd.f32 %v1548, %v1435
    %v1550 = vadd.f32 %v1549, %v1437
    %v1551 = vadd.f32 %v1550, %v1439
    %v1552 = vadd.f32 %v1551, %v1441
    %v1553 = vadd.f32 %v1552, %v1443
    %v1554 = vadd.f32 %v1553, %v1445
    %v1555 = vadd.f32 %v1554, %v1447
    %v1556 = vadd.f32 %v1555, %v1449
    %v1557 = vadd.f32 %v1556, %v1451
    %v1558 = vrot.slane %v1557, 4
    %v1559 = vadd.f32 %v1557, %v1558
    %v1560 = vrot.slane %v1559, 2
    %v1561 = vadd.f32 %v1559, %v1560
    %v1562 = vrot.slane %v1561, 1
    %v1563 = vadd.f32 %v1561, %v1562
    %v1564 = vadd.f32 %v1390, %v1392
    %v1565 = vadd.f32 %v1564, %v1394
    %v1566 = vadd.f32 %v1565, %v1396
    %v1567 = vadd.f32 %v1566, %v1398
    %v1568 = vadd.f32 %v1567, %v1400
    %v1569 = vadd.f32 %v1568, %v1402
    %v1570 = vadd.f32 %v1569, %v1404
    %v1571 = vadd.f32 %v1570, %v1406
    %v1572 = vadd.f32 %v1571, %v1408
    %v1573 = vadd.f32 %v1572, %v1410
    %v1574 = vadd.f32 %v1573, %v1412
    %v1575 = vadd.f32 %v1574, %v1414
    %v1576 = vadd.f32 %v1575, %v1416
    %v1577 = vadd.f32 %v1576, %v1418
    %v1578 = vadd.f32 %v1577, %v1420
    %v1579 = vadd.f32 %v1578, %v1422
    %v1580 = vadd.f32 %v1579, %v1424
    %v1581 = vadd.f32 %v1580, %v1426
    %v1582 = vadd.f32 %v1581, %v1428
    %v1583 = vadd.f32 %v1582, %v1430
    %v1584 = vadd.f32 %v1583, %v1432
    %v1585 = vadd.f32 %v1584, %v1434
    %v1586 = vadd.f32 %v1585, %v1436
    %v1587 = vadd.f32 %v1586, %v1438
    %v1588 = vadd.f32 %v1587, %v1440
    %v1589 = vadd.f32 %v1588, %v1442
    %v1590 = vadd.f32 %v1589, %v1444
    %v1591 = vadd.f32 %v1590, %v1446
    %v1592 = vadd.f32 %v1591, %v1448
    %v1593 = vadd.f32 %v1592, %v1450
    %v1594 = vadd.f32 %v1593, %v1452
    %v1595 = vrot.slane %v1594, 4
    %v1596 = vadd.f32 %v1594, %v1595
    %v1597 = vrot.slane %v1596, 2
    %v1598 = vadd.f32 %v1596, %v1597
    %v1599 = vrot.slane %v1598, 1
    %v1600 = vadd.f32 %v1598, %v1599
    %v1601 = vmul.f32 %v1489, 0.00390625
    %v1602 = vmul.f32 %v1526, 0.00390625
    %v1603 = vmul.f32 %v1563, 0.00390625
    %v1604 = vmul.f32 %v1600, 0.00390625
    %v1605 = vmul.f32 %v1601, %v1601
    %v1606 = vmul.f32 %v1602, %v1602
    %v1607 = vsub.f32 %v1603, %v1605
    %v1608 = vsub.f32 %v1604, %v1606
    %v1609 = vadd.f32 %v1607, 1e-05
    %v1610 = vadd.f32 %v1608, 1e-05
    %v1611 = vrsqrt.pop %v1609
    %v1612 = vrsqrt.pop %v1610
    %v1615 = vcombine.low %v1611, %v1612
    %v1617 = vunpack.c.l.s4 1966171168
    %v1618 = vunpack.c.0.s8 %v1617
    %v1619 = vlaneseq
    %v1620 = vshrl.u32 %v1619, 7
    %v1621 = vsub.s32 %v1618, %v1620
    %v1622 = vrot.slane %v1615, %v1621
    %v1624 = vunpack.c.l.s4 1966171168
    %v1625 = vunpack.c.0.s8 %v1624
    %v1626 = vlaneseq
    %v1627 = vshrl.u32 %v1626, 7
    %v1628 = vsub.s32 %v1625, %v1627
    %v1629 = vrot.slane %v1622, %v1628
    %v1631 = vmul.f32 %v1097, %v1629
    %v1633 = vlaneseq
    %v1634 = vshrl.u32 %v1633, 7
    %v1635 = vsub.s32 0, %v1634
    %v1636 = vrot.slane %v1631, %v1635
    %v1637 = vlaneseq
    %v1638 = vshrl.u32 %v1637, 7
    %v1639 = vsub.s32 1, %v1638
    %v1640 = vrot.slane %v1631, %v1639
    %v1643 = vmul.f32 %v1601, %v1636
    %v1644 = vmul.f32 %v1602, %v1640
    %v1647 = vcombine.low %v1643, %v1644
    %v1649 = vunpack.c.l.s4 1966171168
    %v1650 = vunpack.c.0.s8 %v1649
    %v1651 = vlaneseq
    %v1652 = vshrl.u32 %v1651, 7
    %v1653 = vsub.s32 %v1650, %v1652
    %v1654 = vrot.slane %v1647, %v1653
    %v1656 = vunpack.c.l.s4 1966171168
    %v1657 = vunpack.c.0.s8 %v1656
    %v1658 = vlaneseq
    %v1659 = vshrl.u32 %v1658, 7
    %v1660 = vsub.s32 %v1657, %v1659
    %v1661 = vrot.slane %v1654, %v1660
    %v1663 = vsub.f32 %v1099, %v1661
    %v1664 = vmul.f32 %v1199, %v1636
    %v1665 = vmul.f32 %v1201, %v1640
    %v1666 = vmul.f32 %v1205, %v1636
    %v1667 = vmul.f32 %v1207, %v1640
    %v1668 = vmul.f32 %v1211, %v1636
    %v1669 = vmul.f32 %v1213, %v1640
    %v1670 = vmul.f32 %v1217, %v1636
    %v1671 = vmul.f32 %v1219, %v1640
    %v1672 = vmul.f32 %v1223, %v1636
    %v1673 = vmul.f32 %v1225, %v1640
    %v1674 = vmul.f32 %v1229, %v1636
    %v1675 = vmul.f32 %v1231, %v1640
    %v1676 = vmul.f32 %v1235, %v1636
    %v1677 = vmul.f32 %v1237, %v1640
    %v1678 = vmul.f32 %v1241, %v1636
    %v1679 = vmul.f32 %v1243, %v1640
    %v1680 = vmul.f32 %v1247, %v1636
    %v1681 = vmul.f32 %v1249, %v1640
    %v1682 = vmul.f32 %v1253, %v1636
    %v1683 = vmul.f32 %v1255, %v1640
    %v1684 = vmul.f32 %v1259, %v1636
    %v1685 = vmul.f32 %v1261, %v1640
    %v1686 = vmul.f32 %v1265, %v1636
    %v1687 = vmul.f32 %v1267, %v1640
    %v1688 = vmul.f32 %v1271, %v1636
    %v1689 = vmul.f32 %v1273, %v1640
    %v1690 = vmul.f32 %v1277, %v1636
    %v1691 = vmul.f32 %v1279, %v1640
    %v1692 = vmul.f32 %v1283, %v1636
    %v1693 = vmul.f32 %v1285, %v1640
    %v1694 = vmul.f32 %v1289, %v1636
    %v1695 = vmul.f32 %v1291, %v1640
    %v1696 = vmul.f32 %v1295, %v1636
    %v1697 = vmul.f32 %v1297, %v1640
    %v1698 = vmul.f32 %v1301, %v1636
    %v1699 = vmul.f32 %v1303, %v1640
    %v1700 = vmul.f32 %v1307, %v1636
    %v1701 = vmul.f32 %v1309, %v1640
    %v1702 = vmul.f32 %v1313, %v1636
    %v1703 = vmul.f32 %v1315, %v1640
    %v1704 = vmul.f32 %v1319, %v1636
    %v1705 = vmul.f32 %v1321, %v1640
    %v1706 = vmul.f32 %v1325, %v1636
    %v1707 = vmul.f32 %v1327, %v1640
    %v1708 = vmul.f32 %v1331, %v1636
    %v1709 = vmul.f32 %v1333, %v1640
    %v1710 = vmul.f32 %v1337, %v1636
    %v1711 = vmul.f32 %v1339, %v1640
    %v1712 = vmul.f32 %v1343, %v1636
    %v1713 = vmul.f32 %v1345, %v1640
    %v1714 = vmul.f32 %v1349, %v1636
    %v1715 = vmul.f32 %v1351, %v1640
    %v1716 = vmul.f32 %v1355, %v1636
    %v1717 = vmul.f32 %v1357, %v1640
    %v1718 = vmul.f32 %v1361, %v1636
    %v1719 = vmul.f32 %v1363, %v1640
    %v1720 = vmul.f32 %v1367, %v1636
    %v1721 = vmul.f32 %v1369, %v1640
    %v1722 = vmul.f32 %v1373, %v1636
    %v1723 = vmul.f32 %v1375, %v1640
    %v1724 = vmul.f32 %v1379, %v1636
    %v1725 = vmul.f32 %v1381, %v1640
    %v1726 = vmul.f32 %v1385, %v1636
    %v1727 = vmul.f32 %v1387, %v1640
    %v1729 = vlaneseq
    %v1730 = vshrl.u32 %v1729, 7
    %v1731 = vsub.s32 0, %v1730
    %v1732 = vrot.slane %v1663, %v1731
    %v1733 = vlaneseq
    %v1734 = vshrl.u32 %v1733, 7
    %v1735 = vsub.s32 1, %v1734
    %v1736 = vrot.slane %v1663, %v1735
    %v1739 = vadd.f32 %v1664, %v1732
    %v1740 = vadd.f32 %v1665, %v1736
    %v1741 = vadd.f32 %v1666, %v1732
    %v1742 = vadd.f32 %v1667, %v1736
    %v1743 = vadd.f32 %v1668, %v1732
    %v1744 = vadd.f32 %v1669, %v1736
    %v1745 = vadd.f32 %v1670, %v1732
    %v1746 = vadd.f32 %v1671, %v1736
    %v1747 = vadd.f32 %v1672, %v1732
    %v1748 = vadd.f32 %v1673, %v1736
    %v1749 = vadd.f32 %v1674, %v1732
    %v1750 = vadd.f32 %v1675, %v1736
    %v1751 = vadd.f32 %v1676, %v1732
    %v1752 = vadd.f32 %v1677, %v1736
    %v1753 = vadd.f32 %v1678, %v1732
    %v1754 = vadd.f32 %v1679, %v1736
    %v1755 = vadd.f32 %v1680, %v1732
    %v1756 = vadd.f32 %v1681, %v1736
    %v1757 = vadd.f32 %v1682, %v1732
    %v1758 = vadd.f32 %v1683, %v1736
    %v1759 = vadd.f32 %v1684, %v1732
    %v1760 = vadd.f32 %v1685, %v1736
    %v1761 = vadd.f32 %v1686, %v1732
    %v1762 = vadd.f32 %v1687, %v1736
    %v1763 = vadd.f32 %v1688, %v1732
    %v1764 = vadd.f32 %v1689, %v1736
    %v1765 = vadd.f32 %v1690, %v1732
    %v1766 = vadd.f32 %v1691, %v1736
    %v1767 = vadd.f32 %v1692, %v1732
    %v1768 = vadd.f32 %v1693, %v1736
    %v1769 = vadd.f32 %v1694, %v1732
    %v1770 = vadd.f32 %v1695, %v1736
    %v1771 = vadd.f32 %v1696, %v1732
    %v1772 = vadd.f32 %v1697, %v1736
    %v1773 = vadd.f32 %v1698, %v1732
    %v1774 = vadd.f32 %v1699, %v1736
    %v1775 = vadd.f32 %v1700, %v1732
    %v1776 = vadd.f32 %v1701, %v1736
    %v1777 = vadd.f32 %v1702, %v1732
    %v1778 = vadd.f32 %v1703, %v1736
    %v1779 = vadd.f32 %v1704, %v1732
    %v1780 = vadd.f32 %v1705, %v1736
    %v1781 = vadd.f32 %v1706, %v1732
    %v1782 = vadd.f32 %v1707, %v1736
    %v1783 = vadd.f32 %v1708, %v1732
    %v1784 = vadd.f32 %v1709, %v1736
    %v1785 = vadd.f32 %v1710, %v1732
    %v1786 = vadd.f32 %v1711, %v1736
    %v1787 = vadd.f32 %v1712, %v1732
    %v1788 = vadd.f32 %v1713, %v1736
    %v1789 = vadd.f32 %v1714, %v1732
    %v1790 = vadd.f32 %v1715, %v1736
    %v1791 = vadd.f32 %v1716, %v1732
    %v1792 = vadd.f32 %v1717, %v1736
    %v1793 = vadd.f32 %v1718, %v1732
    %v1794 = vadd.f32 %v1719, %v1736
    %v1795 = vadd.f32 %v1720, %v1732
    %v1796 = vadd.f32 %v1721, %v1736
    %v1797 = vadd.f32 %v1722, %v1732
    %v1798 = vadd.f32 %v1723, %v1736
    %v1799 = vadd.f32 %v1724, %v1732
    %v1800 = vadd.f32 %v1725, %v1736
    %v1801 = vadd.f32 %v1726, %v1732
    %v1802 = vadd.f32 %v1727, %v1736
    %v1803 = vmax.f32 %v1739, 0.0
    %v1804 = vmax.f32 %v1740, 0.0
    %v1805 = vmax.f32 %v1741, 0.0
    %v1806 = vmax.f32 %v1742, 0.0
    %v1807 = vmax.f32 %v1743, 0.0
    %v1808 = vmax.f32 %v1744, 0.0
    %v1809 = vmax.f32 %v1745, 0.0
    %v1810 = vmax.f32 %v1746, 0.0
    %v1811 = vmax.f32 %v1747, 0.0
    %v1812 = vmax.f32 %v1748, 0.0
    %v1813 = vmax.f32 %v1749, 0.0
    %v1814 = vmax.f32 %v1750, 0.0
    %v1815 = vmax.f32 %v1751, 0.0
    %v1816 = vmax.f32 %v1752, 0.0
    %v1817 = vmax.f32 %v1753, 0.0
    %v1818 = vmax.f32 %v1754, 0.0
    %v1819 = vmax.f32 %v1755, 0.0
    %v1820 = vmax.f32 %v1756, 0.0
    %v1821 = vmax.f32 %v1757, 0.0
    %v1822 = vmax.f32 %v1758, 0.0
    %v1823 = vmax.f32 %v1759, 0.0
    %v1824 = vmax.f32 %v1760, 0.0
    %v1825 = vmax.f32 %v1761, 0.0
    %v1826 = vmax.f32 %v1762, 0.0
    %v1827 = vmax.f32 %v1763, 0.0
    %v1828 = vmax.f32 %v1764, 0.0
    %v1829 = vmax.f32 %v1765, 0.0
    %v1830 = vmax.f32 %v1766, 0.0
    %v1831 = vmax.f32 %v1767, 0.0
    %v1832 = vmax.f32 %v1768, 0.0
    %v1833 = vmax.f32 %v1769, 0.0
    %v1834 = vmax.f32 %v1770, 0.0
    %v1835 = vmax.f32 %v1771, 0.0
    %v1836 = vmax.f32 %v1772, 0.0
    %v1837 = vmax.f32 %v1773, 0.0
    %v1838 = vmax.f32 %v1774, 0.0
    %v1839 = vmax.f32 %v1775, 0.0
    %v1840 = vmax.f32 %v1776, 0.0
    %v1841 = vmax.f32 %v1777, 0.0
    %v1842 = vmax.f32 %v1778, 0.0
    %v1843 = vmax.f32 %v1779, 0.0
    %v1844 = vmax.f32 %v1780, 0.0
    %v1845 = vmax.f32 %v1781, 0.0
    %v1846 = vmax.f32 %v1782, 0.0
    %v1847 = vmax.f32 %v1783, 0.0
    %v1848 = vmax.f32 %v1784, 0.0
    %v1849 = vmax.f32 %v1785, 0.0
    %v1850 = vmax.f32 %v1786, 0.0
    %v1851 = vmax.f32 %v1787, 0.0
    %v1852 = vmax.f32 %v1788, 0.0
    %v1853 = vmax.f32 %v1789, 0.0
    %v1854 = vmax.f32 %v1790, 0.0
    %v1855 = vmax.f32 %v1791, 0.0
    %v1856 = vmax.f32 %v1792, 0.0
    %v1857 = vmax.f32 %v1793, 0.0
    %v1858 = vmax.f32 %v1794, 0.0
    %v1859 = vmax.f32 %v1795, 0.0
    %v1860 = vmax.f32 %v1796, 0.0
    %v1861 = vmax.f32 %v1797, 0.0
    %v1862 = vmax.f32 %v1798, 0.0
    %v1863 = vmax.f32 %v1799, 0.0
    %v1864 = vmax.f32 %v1800, 0.0
    %v1865 = vmax.f32 %v1801, 0.0
    %v1866 = vmax.f32 %v1802, 0.0
    %v1867 = vld [vmem:[#allocation9] sm:$0xff]
    %v1868 = vld [vmem:[#allocation9 + $0x8] sm:$0xff]
    %v1869 = vld [vmem:[#allocation9 + $0x10] sm:$0xff]
    %v1870 = vld [vmem:[#allocation9 + $0x18] sm:$0xff]
    %v1871 = vld [vmem:[#allocation9 + $0x20] sm:$0xff]
    %v1872 = vld [vmem:[#allocation9 + $0x28] sm:$0xff]
    %v1873 = vld [vmem:[#allocation9 + $0x30] sm:$0xff]
    %v1874 = vld [vmem:[#allocation9 + $0x38] sm:$0xff]
    %v1875 = vld [vmem:[#allocation9 + $0x40] sm:$0xff]
    %v1876 = vld [vmem:[#allocation9 + $0x48] sm:$0xff]
    %v1877 = vld [vmem:[#allocation9 + $0x50] sm:$0xff]
    %v1878 = vld [vmem:[#allocation9 + $0x58] sm:$0xff]
    %v1879 = vld [vmem:[#allocation9 + $0x60] sm:$0xff]
    %v1880 = vld [vmem:[#allocation9 + $0x68] sm:$0xff]
    %v1881 = vld [vmem:[#allocation9 + $0x70] sm:$0xff]
    %v1882 = vld [vmem:[#allocation9 + $0x78] sm:$0xff]
    %v1883 = vld [vmem:[#allocation9 + $0x80] sm:$0xff]
    %v1884 = vld [vmem:[#allocation9 + $0x88] sm:$0xff]
    %v1885 = vld [vmem:[#allocation9 + $0x90] sm:$0xff]
    %v1886 = vld [vmem:[#allocation9 + $0x98] sm:$0xff]
    %v1887 = vld [vmem:[#allocation9 + $0xa0] sm:$0xff]
    %v1888 = vld [vmem:[#allocation9 + $0xa8] sm:$0xff]
    %v1889 = vld [vmem:[#allocation9 + $0xb0] sm:$0xff]
    %v1890 = vld [vmem:[#allocation9 + $0xb8] sm:$0xff]
    %v1891 = vld [vmem:[#allocation9 + $0xc0] sm:$0xff]
    %v1892 = vld [vmem:[#allocation9 + $0xc8] sm:$0xff]
    %v1893 = vld [vmem:[#allocation9 + $0xd0] sm:$0xff]
    %v1894 = vld [vmem:[#allocation9 + $0xd8] sm:$0xff]
    %v1895 = vld [vmem:[#allocation9 + $0xe0] sm:$0xff]
    %v1896 = vld [vmem:[#allocation9 + $0xe8] sm:$0xff]
    %v1897 = vld [vmem:[#allocation9 + $0xf0] sm:$0xff]
    %v1898 = vld [vmem:[#allocation9 + $0xf8] sm:$0xff]
    %v1899 = vld [vmem:[#allocation9 + $0x100] sm:$0xff]
    %v1900 = vld [vmem:[#allocation9 + $0x108] sm:$0xff]
    %v1901 = vld [vmem:[#allocation9 + $0x110] sm:$0xff]
    %v1902 = vld [vmem:[#allocation9 + $0x118] sm:$0xff]
    %v1903 = vld [vmem:[#allocation9 + $0x120] sm:$0xff]
    %v1904 = vld [vmem:[#allocation9 + $0x128] sm:$0xff]
    %v1905 = vld [vmem:[#allocation9 + $0x130] sm:$0xff]
    %v1906 = vld [vmem:[#allocation9 + $0x138] sm:$0xff]
    %v1907 = vld [vmem:[#allocation9 + $0x140] sm:$0xff]
    %v1908 = vld [vmem:[#allocation9 + $0x148] sm:$0xff]
    %v1909 = vld [vmem:[#allocation9 + $0x150] sm:$0xff]
    %v1910 = vld [vmem:[#allocation9 + $0x158] sm:$0xff]
    %v1911 = vld [vmem:[#allocation9 + $0x160] sm:$0xff]
    %v1912 = vld [vmem:[#allocation9 + $0x168] sm:$0xff]
    %v1913 = vld [vmem:[#allocation9 + $0x170] sm:$0xff]
    %v1914 = vld [vmem:[#allocation9 + $0x178] sm:$0xff]
    %v1915 = vld [vmem:[#allocation9 + $0x180] sm:$0xff]
    %v1916 = vld [vmem:[#allocation9 + $0x188] sm:$0xff]
    %v1917 = vld [vmem:[#allocation9 + $0x190] sm:$0xff]
    %v1918 = vld [vmem:[#allocation9 + $0x198] sm:$0xff]
    %v1919 = vld [vmem:[#allocation9 + $0x1a0] sm:$0xff]
    %v1920 = vld [vmem:[#allocation9 + $0x1a8] sm:$0xff]
    %v1921 = vld [vmem:[#allocation9 + $0x1b0] sm:$0xff]
    %v1922 = vld [vmem:[#allocation9 + $0x1b8] sm:$0xff]
    %v1923 = vld [vmem:[#allocation9 + $0x1c0] sm:$0xff]
    %v1924 = vld [vmem:[#allocation9 + $0x1c8] sm:$0xff]
    %v1925 = vld [vmem:[#allocation9 + $0x1d0] sm:$0xff]
    %v1926 = vld [vmem:[#allocation9 + $0x1d8] sm:$0xff]
    %v1927 = vld [vmem:[#allocation9 + $0x1e0] sm:$0xff]
    %v1928 = vld [vmem:[#allocation9 + $0x1e8] sm:$0xff]
    %v1929 = vld [vmem:[#allocation9 + $0x1f0] sm:$0xff]
    %v1930 = vld [vmem:[#allocation9 + $0x1f8] sm:$0xff]
    %s1931 = scalar_lea.vmem %s5, 6
    %v1932 = vld [vmem:[%s1931] ss:$8 sm:$0x3]
    %v1934 = vlaneseq
    %v1935 = vshrl.u32 %v1934, 7
    %v1936 = vsub.s32 0, %v1935
    %v1937 = vrot.slane %v1932, %v1936
    %v1938 = vlaneseq
    %v1939 = vshrl.u32 %v1938, 7
    %v1940 = vsub.s32 1, %v1939
    %v1941 = vrot.slane %v1932, %v1940
    %1944 = vmatprep.subr.mxu0 %v1868
    %1945 = vmatpush1.msra.mxu0 %v1867
    %1946 = vmatprep.subr.mxu0 %v1870
    %1947 = vmatpush1.msra.mxu0 %v1869
    %1948 = vmatprep.subr.mxu0 %v1872
    %1949 = vmatpush1.msra.mxu0 %v1871
    %1950 = vmatprep.subr.mxu0 %v1874
    %1951 = vmatpush1.msra.mxu0 %v1873
    %1952 = vmatprep.subr.mxu0 %v1876
    %1953 = vmatpush1.msra.mxu0 %v1875
    %1954 = vmatprep.subr.mxu0 %v1878
    %1955 = vmatpush1.msra.mxu0 %v1877
    %1956 = vmatprep.subr.mxu0 %v1880
    %1957 = vmatpush1.msra.mxu0 %v1879
    %1958 = vmatprep.subr.mxu0 %v1882
    %1959 = vmatpush1.msra.mxu0 %v1881
    %1960 = vmatprep.subr.mxu0 %v1884
    %1961 = vmatpush1.msra.mxu0 %v1883
    %1962 = vmatprep.subr.mxu0 %v1886
    %1963 = vmatpush1.msra.mxu0 %v1885
    %1964 = vmatprep.subr.mxu0 %v1888
    %1965 = vmatpush1.msra.mxu0 %v1887
    %1966 = vmatprep.subr.mxu0 %v1890
    %1967 = vmatpush1.msra.mxu0 %v1889
    %1968 = vmatprep.subr.mxu0 %v1892
    %1969 = vmatpush1.msra.mxu0 %v1891
    %1970 = vmatprep.subr.mxu0 %v1894
    %1971 = vmatpush1.msra.mxu0 %v1893
    %1972 = vmatprep.subr.mxu0 %v1896
    %1973 = vmatpush1.msra.mxu0 %v1895
    %1974 = vmatprep.subr.mxu0 %v1898
    %1975 = vmatpush1.msra.mxu0 %v1897
    %1976 = vmatprep.subr.mxu0 %v1900
    %1977 = vmatpush1.msra.mxu0 %v1899
    %1978 = vmatprep.subr.mxu0 %v1902
    %1979 = vmatpush1.msra.mxu0 %v1901
    %1980 = vmatprep.subr.mxu0 %v1904
    %1981 = vmatpush1.msra.mxu0 %v1903
    %1982 = vmatprep.subr.mxu0 %v1906
    %1983 = vmatpush1.msra.mxu0 %v1905
    %1984 = vmatprep.subr.mxu0 %v1908
    %1985 = vmatpush1.msra.mxu0 %v1907
    %1986 = vmatprep.subr.mxu0 %v1910
    %1987 = vmatpush1.msra.mxu0 %v1909
    %1988 = vmatprep.subr.mxu0 %v1912
    %1989 = vmatpush1.msra.mxu0 %v1911
    %1990 = vmatprep.subr.mxu0 %v1914
    %1991 = vmatpush1.msra.mxu0 %v1913
    %1992 = vmatprep.subr.mxu0 %v1916
    %1993 = vmatpush1.msra.mxu0 %v1915
    %1994 = vmatprep.subr.mxu0 %v1918
    %1995 = vmatpush1.msra.mxu0 %v1917
    %1996 = vmatprep.subr.mxu0 %v1920
    %1997 = vmatpush1.msra.mxu0 %v1919
    %1998 = vmatprep.subr.mxu0 %v1922
    %1999 = vmatpush1.msra.mxu0 %v1921
    %2000 = vmatprep.subr.mxu0 %v1924
    %2001 = vmatpush1.msra.mxu0 %v1923
    %2002 = vmatprep.subr.mxu0 %v1926
    %2003 = vmatpush1.msra.mxu0 %v1925
    %2004 = vmatprep.subr.mxu0 %v1928
    %2005 = vmatpush1.msra.mxu0 %v1927
    %2006 = vmatprep.subr.mxu0 %v1930
    %2007 = vmatpush1.msra.mxu0 %v1929
    %2008 = vmatprep.mubr.f32.mxu0 %v1804
    %2009 = vmatmul.mubr.f32.gmra.mrb[0].mxu0 %v1803
    %v2010 = vpop.f32.mrb[0].mxu0
    %v2011 = vadd.f32 %v1937, %v2010
    %v2012 = vpop.f32.mrb[0].mxu0
    %v2013 = vadd.f32 %v1941, %v2012
    %2014 = vmatprep.mubr.f32.mxu0 %v1806
    %2015 = vmatmul.mubr.f32.gmra.mrb[0].mxu0 %v1805
    %v2016 = vpop.f32.mrb[0].mxu0
    %v2017 = vadd.f32 %v1937, %v2016
    %v2018 = vpop.f32.mrb[0].mxu0
    %v2019 = vadd.f32 %v1941, %v2018
    %2020 = vmatprep.mubr.f32.mxu0 %v1808
    %2021 = vmatmul.mubr.f32.gmra.mrb[0].mxu0 %v1807
    %v2022 = vpop.f32.mrb[0].mxu0
    %v2023 = vadd.f32 %v1937, %v2022
    %v2024 = vpop.f32.mrb[0].mxu0
    %v2025 = vadd.f32 %v1941, %v2024
    %2026 = vmatprep.mubr.f32.mxu0 %v1810
    %2027 = vmatmul.mubr.f32.gmra.mrb[0].mxu0 %v1809
    %v2028 = vpop.f32.mrb[0].mxu0
    %v2029 = vadd.f32 %v1937, %v2028
    %v2030 = vpop.f32.mrb[0].mxu0
    %v2031 = vadd.f32 %v1941, %v2030
    %2032 = vmatprep.mubr.f32.mxu0 %v1812
    %2033 = vmatmul.mubr.f32.gmra.mrb[0].mxu0 %v1811
    %v2034 = vpop.f32.mrb[0].mxu0
    %v2035 = vadd.f32 %v1937, %v2034
    %v2036 = vpop.f32.mrb[0].mxu0
    %v2037 = vadd.f32 %v1941, %v2036
    %2038 = vmatprep.mubr.f32.mxu0 %v1814
    %2039 = vmatmul.mubr.f32.gmra.mrb[0].mxu0 %v1813
    %v2040 = vpop.f32.mrb[0].mxu0
    %v2041 = vadd.f32 %v1937, %v2040
    %v2042 = vpop.f32.mrb[0].mxu0
    %v2043 = vadd.f32 %v1941, %v2042
    %2044 = vmatprep.mubr.f32.mxu0 %v1816
    %2045 = vmatmul.mubr.f32.gmra.mrb[0].mxu0 %v1815
    %v2046 = vpop.f32.mrb[0].mxu0
    %v2047 = vadd.f32 %v1937, %v2046
    %v2048 = vpop.f32.mrb[0].mxu0
    %v2049 = vadd.f32 %v1941, %v2048
    %2050 = vmatprep.mubr.f32.mxu0 %v1818
    %2051 = vmatmul.mubr.f32.gmra.mrb[0].mxu0 %v1817
    %v2052 = vpop.f32.mrb[0].mxu0
    %v2053 = vadd.f32 %v1937, %v2052
    %v2054 = vpop.f32.mrb[0].mxu0
    %v2055 = vadd.f32 %v1941, %v2054
    %2056 = vmatprep.mubr.f32.mxu0 %v1820
    %2057 = vmatmul.mubr.f32.gmra.mrb[0].mxu0 %v1819
    %v2058 = vpop.f32.mrb[0].mxu0
    %v2059 = vadd.f32 %v1937, %v2058
    %v2060 = vpop.f32.mrb[0].mxu0
    %v2061 = vadd.f32 %v1941, %v2060
    %2062 = vmatprep.mubr.f32.mxu0 %v1822
    %2063 = vmatmul.mubr.f32.gmra.mrb[0].mxu0 %v1821
    %v2064 = vpop.f32.mrb[0].mxu0
    %v2065 = vadd.f32 %v1937, %v2064
    %v2066 = vpop.f32.mrb[0].mxu0
    %v2067 = vadd.f32 %v1941, %v2066
    %2068 = vmatprep.mubr.f32.mxu0 %v1824
    %2069 = vmatmul.mubr.f32.gmra.mrb[0].mxu0 %v1823
    %v2070 = vpop.f32.mrb[0].mxu0
    %v2071 = vadd.f32 %v1937, %v2070
    %v2072 = vpop.f32.mrb[0].mxu0
    %v2073 = vadd.f32 %v1941, %v2072
    %2074 = vmatprep.mubr.f32.mxu0 %v1826
    %2075 = vmatmul.mubr.f32.gmra.mrb[0].mxu0 %v1825
    %v2076 = vpop.f32.mrb[0].mxu0
    %v2077 = vadd.f32 %v1937, %v2076
    %v2078 = vpop.f32.mrb[0].mxu0
    %v2079 = vadd.f32 %v1941, %v2078
    %2080 = vmatprep.mubr.f32.mxu0 %v1828
    %2081 = vmatmul.mubr.f32.gmra.mrb[0].mxu0 %v1827
    %v2082 = vpop.f32.mrb[0].mxu0
    %v2083 = vadd.f32 %v1937, %v2082
    %v2084 = vpop.f32.mrb[0].mxu0
    %v2085 = vadd.f32 %v1941, %v2084
    %2086 = vmatprep.mubr.f32.mxu0 %v1830
    %2087 = vmatmul.mubr.f32.gmra.mrb[0].mxu0 %v1829
    %v2088 = vpop.f32.mrb[0].mxu0
    %v2089 = vadd.f32 %v1937, %v2088
    %v2090 = vpop.f32.mrb[0].mxu0
    %v2091 = vadd.f32 %v1941, %v2090
    %2092 = vmatprep.mubr.f32.mxu0 %v1832
    %2093 = vmatmul.mubr.f32.gmra.mrb[0].mxu0 %v1831
    %v2094 = vpop.f32.mrb[0].mxu0
    %v2095 = vadd.f32 %v1937, %v2094
    %v2096 = vpop.f32.mrb[0].mxu0
    %v2097 = vadd.f32 %v1941, %v2096
    %2098 = vmatprep.mubr.f32.mxu0 %v1834
    %2099 = vmatmul.mubr.f32.gmra.mrb[0].mxu0 %v1833
    %v2100 = vpop.f32.mrb[0].mxu0
    %v2101 = vadd.f32 %v1937, %v2100
    %v2102 = vpop.f32.mrb[0].mxu0
    %v2103 = vadd.f32 %v1941, %v2102
    %2104 = vmatprep.mubr.f32.mxu0 %v1836
    %2105 = vmatmul.mubr.f32.gmra.mrb[0].mxu0 %v1835
    %v2106 = vpop.f32.mrb[0].mxu0
    %v2107 = vadd.f32 %v1937, %v2106
    %v2108 = vpop.f32.mrb[0].mxu0
    %v2109 = vadd.f32 %v1941, %v2108
    %2110 = vmatprep.mubr.f32.mxu0 %v1838
    %2111 = vmatmul.mubr.f32.gmra.mrb[0].mxu0 %v1837
    %v2112 = vpop.f32.mrb[0].mxu0
    %v2113 = vadd.f32 %v1937, %v2112
    %v2114 = vpop.f32.mrb[0].mxu0
    %v2115 = vadd.f32 %v1941, %v2114
    %2116 = vmatprep.mubr.f32.mxu0 %v1840
    %2117 = vmatmul.mubr.f32.gmra.mrb[0].mxu0 %v1839
    %v2118 = vpop.f32.mrb[0].mxu0
    %v2119 = vadd.f32 %v1937, %v2118
    %v2120 = vpop.f32.mrb[0].mxu0
    %v2121 = vadd.f32 %v1941, %v2120
    %2122 = vmatprep.mubr.f32.mxu0 %v1842
    %2123 = vmatmul.mubr.f32.gmra.mrb[0].mxu0 %v1841
    %v2124 = vpop.f32.mrb[0].mxu0
    %v2125 = vadd.f32 %v1937, %v2124
    %v2126 = vpop.f32.mrb[0].mxu0
    %v2127 = vadd.f32 %v1941, %v2126
    %2128 = vmatprep.mubr.f32.mxu0 %v1844
    %2129 = vmatmul.mubr.f32.gmra.mrb[0].mxu0 %v1843
    %v2130 = vpop.f32.mrb[0].mxu0
    %v2131 = vadd.f32 %v1937, %v2130
    %v2132 = vpop.f32.mrb[0].mxu0
    %v2133 = vadd.f32 %v1941, %v2132
    %2134 = vmatprep.mubr.f32.mxu0 %v1846
    %2135 = vmatmul.mubr.f32.gmra.mrb[0].mxu0 %v1845
    %v2136 = vpop.f32.mrb[0].mxu0
    %v2137 = vadd.f32 %v1937, %v2136
    %v2138 = vpop.f32.mrb[0].mxu0
    %v2139 = vadd.f32 %v1941, %v2138
    %2140 = vmatprep.mubr.f32.mxu0 %v1848
    %2141 = vmatmul.mubr.f32.gmra.mrb[0].mxu0 %v1847
    %v2142 = vpop.f32.mrb[0].mxu0
    %v2143 = vadd.f32 %v1937, %v2142
    %v2144 = vpop.f32.mrb[0].mxu0
    %v2145 = vadd.f32 %v1941, %v2144
    %2146 = vmatprep.mubr.f32.mxu0 %v1850
    %2147 = vmatmul.mubr.f32.gmra.mrb[0].mxu0 %v1849
    %v2148 = vpop.f32.mrb[0].mxu0
    %v2149 = vadd.f32 %v1937, %v2148
    %v2150 = vpop.f32.mrb[0].mxu0
    %v2151 = vadd.f32 %v1941, %v2150
    %2152 = vmatprep.mubr.f32.mxu0 %v1852
    %2153 = vmatmul.mubr.f32.gmra.mrb[0].mxu0 %v1851
    %v2154 = vpop.f32.mrb[0].mxu0
    %v2155 = vadd.f32 %v1937, %v2154
    %v2156 = vpop.f32.mrb[0].mxu0
    %v2157 = vadd.f32 %v1941, %v2156
    %2158 = vmatprep.mubr.f32.mxu0 %v1854
    %2159 = vmatmul.mubr.f32.gmra.mrb[0].mxu0 %v1853
    %v2160 = vpop.f32.mrb[0].mxu0
    %v2161 = vadd.f32 %v1937, %v2160
    %v2162 = vpop.f32.mrb[0].mxu0
    %v2163 = vadd.f32 %v1941, %v2162
    %2164 = vmatprep.mubr.f32.mxu0 %v1856
    %2165 = vmatmul.mubr.f32.gmra.mrb[0].mxu0 %v1855
    %v2166 = vpop.f32.mrb[0].mxu0
    %v2167 = vadd.f32 %v1937, %v2166
    %v2168 = vpop.f32.mrb[0].mxu0
    %v2169 = vadd.f32 %v1941, %v2168
    %2170 = vmatprep.mubr.f32.mxu0 %v1858
    %2171 = vmatmul.mubr.f32.gmra.mrb[0].mxu0 %v1857
    %v2172 = vpop.f32.mrb[0].mxu0
    %v2173 = vadd.f32 %v1937, %v2172
    %v2174 = vpop.f32.mrb[0].mxu0
    %v2175 = vadd.f32 %v1941, %v2174
    %2176 = vmatprep.mubr.f32.mxu0 %v1860
    %2177 = vmatmul.mubr.f32.gmra.mrb[0].mxu0 %v1859
    %v2178 = vpop.f32.mrb[0].mxu0
    %v2179 = vadd.f32 %v1937, %v2178
    %v2180 = vpop.f32.mrb[0].mxu0
    %v2181 = vadd.f32 %v1941, %v2180
    %2182 = vmatprep.mubr.f32.mxu0 %v1862
    %2183 = vmatmul.mubr.f32.gmra.mrb[0].mxu0 %v1861
    %v2184 = vpop.f32.mrb[0].mxu0
    %v2185 = vadd.f32 %v1937, %v2184
    %v2186 = vpop.f32.mrb[0].mxu0
    %v2187 = vadd.f32 %v1941, %v2186
    %2188 = vmatprep.mubr.f32.mxu0 %v1864
    %2189 = vmatmul.mubr.f32.gmra.mrb[0].mxu0 %v1863
    %v2190 = vpop.f32.mrb[0].mxu0
    %v2191 = vadd.f32 %v1937, %v2190
    %v2192 = vpop.f32.mrb[0].mxu0
    %v2193 = vadd.f32 %v1941, %v2192
    %2194 = vmatprep.mubr.f32.mxu0 %v1866
    %2195 = vmatmul.mubr.f32.gmra.mrb[0].mxu0 %v1865
    %v2196 = vpop.f32.mrb[0].mxu0
    %v2197 = vadd.f32 %v1937, %v2196
    %v2198 = vpop.f32.mrb[0].mxu0
    %v2199 = vadd.f32 %v1941, %v2198
    %2200 = vdwg.mxu0
    %v2201 = vmul.f32 %v2013, 0.5
    %v2202 = vmul.f32 %v2019, 0.5
    %v2203 = vmul.f32 %v2025, 0.5
    %v2204 = vmul.f32 %v2031, 0.5
    %v2205 = vmul.f32 %v2037, 0.5
    %v2206 = vmul.f32 %v2043, 0.5
    %v2207 = vmul.f32 %v2049, 0.5
    %v2208 = vmul.f32 %v2055, 0.5
    %v2209 = vmul.f32 %v2061, 0.5
    %v2210 = vmul.f32 %v2067, 0.5
    %v2211 = vmul.f32 %v2073, 0.5
    %v2212 = vmul.f32 %v2079, 0.5
    %v2213 = vmul.f32 %v2085, 0.5
    %v2214 = vmul.f32 %v2091, 0.5
    %v2215 = vmul.f32 %v2097, 0.5
    %v2216 = vmul.f32 %v2103, 0.5
    %v2217 = vmul.f32 %v2109, 0.5
    %v2218 = vmul.f32 %v2115, 0.5
    %v2219 = vmul.f32 %v2121, 0.5
    %v2220 = vmul.f32 %v2127, 0.5
    %v2221 = vmul.f32 %v2133, 0.5
    %v2222 = vmul.f32 %v2139, 0.5
    %v2223 = vmul.f32 %v2145, 0.5
    %v2224 = vmul.f32 %v2151, 0.5
    %v2225 = vmul.f32 %v2157, 0.5
    %v2226 = vmul.f32 %v2163, 0.5
    %v2227 = vmul.f32 %v2169, 0.5
    %v2228 = vmul.f32 %v2175, 0.5
    %v2229 = vmul.f32 %v2181, 0.5
    %v2230 = vmul.f32 %v2187, 0.5
    %v2231 = vmul.f32 %v2193, 0.5
    %v2232 = vmul.f32 %v2199, 0.5
    %v2233 = vmul.f32 %v2201, 1.442695
    %v2234 = vpow.pop %v2233
    %v2235 = vmul.f32 %v2202, 1.442695
    %v2236 = vpow.pop %v2235
    %v2237 = vmul.f32 %v2203, 1.442695
    %v2238 = vpow.pop %v2237
    %v2239 = vmul.f32 %v2204, 1.442695
    %v2240 = vpow.pop %v2239
    %v2241 = vmul.f32 %v2205, 1.442695
    %v2242 = vpow.pop %v2241
    %v2243 = vmul.f32 %v2206, 1.442695
    %v2244 = vpow.pop %v2243
    %v2245 = vmul.f32 %v2207, 1.442695
    %v2246 = vpow.pop %v2245
    %v2247 = vmul.f32 %v2208, 1.442695
    %v2248 = vpow.pop %v2247
    %v2249 = vmul.f32 %v2209, 1.442695
    %v2250 = vpow.pop %v2249
    %v2251 = vmul.f32 %v2210, 1.442695
    %v2252 = vpow.pop %v2251
    %v2253 = vmul.f32 %v2211, 1.442695
    %v2254 = vpow.pop %v2253
    %v2255 = vmul.f32 %v2212, 1.442695
    %v2256 = vpow.pop %v2255
    %v2257 = vmul.f32 %v2213, 1.442695
    %v2258 = vpow.pop %v2257
    %v2259 = vmul.f32 %v2214, 1.442695
    %v2260 = vpow.pop %v2259
    %v2261 = vmul.f32 %v2215, 1.442695
    %v2262 = vpow.pop %v2261
    %v2263 = vmul.f32 %v2216, 1.442695
    %v2264 = vpow.pop %v2263
    %v2265 = vmul.f32 %v2217, 1.442695
    %v2266 = vpow.pop %v2265
    %v2267 = vmul.f32 %v2218, 1.442695
    %v2268 = vpow.pop %v2267
    %v2269 = vmul.f32 %v2219, 1.442695
    %v2270 = vpow.pop %v2269
    %v2271 = vmul.f32 %v2220, 1.442695
    %v2272 = vpow.pop %v2271
    %v2273 = vmul.f32 %v2221, 1.442695
    %v2274 = vpow.pop %v2273
    %v2275 = vmul.f32 %v2222, 1.442695
    %v2276 = vpow.pop %v2275
    %v2277 = vmul.f32 %v2223, 1.442695
    %v2278 = vpow.pop %v2277
    %v2279 = vmul.f32 %v2224, 1.442695
    %v2280 = vpow.pop %v2279
    %v2281 = vmul.f32 %v2225, 1.442695
    %v2282 = vpow.pop %v2281
    %v2283 = vmul.f32 %v2226, 1.442695
    %v2284 = vpow.pop %v2283
    %v2285 = vmul.f32 %v2227, 1.442695
    %v2286 = vpow.pop %v2285
    %v2287 = vmul.f32 %v2228, 1.442695
    %v2288 = vpow.pop %v2287
    %v2289 = vmul.f32 %v2229, 1.442695
    %v2290 = vpow.pop %v2289
    %v2291 = vmul.f32 %v2230, 1.442695
    %v2292 = vpow.pop %v2291
    %v2293 = vmul.f32 %v2231, 1.442695
    %v2294 = vpow.pop %v2293
    %v2295 = vmul.f32 %v2232, 1.442695
    %v2296 = vpow.pop %v2295
    %v2297 = vld [vmem:[#allocation10] sm:$0xff]
    %v2298 = vld [vmem:[#allocation10 + $0x8] sm:$0xff]
    %v2299 = vld [vmem:[#allocation10 + $0x10] sm:$0xff]
    %v2300 = vld [vmem:[#allocation10 + $0x18] sm:$0xff]
    %v2301 = vld [vmem:[#allocation10 + $0x20] sm:$0xff]
    %v2302 = vld [vmem:[#allocation10 + $0x28] sm:$0xff]
    %v2303 = vld [vmem:[#allocation10 + $0x30] sm:$0xff]
    %v2304 = vld [vmem:[#allocation10 + $0x38] sm:$0xff]
    %v2305 = vld [vmem:[#allocation10 + $0x40] sm:$0xff]
    %v2306 = vld [vmem:[#allocation10 + $0x48] sm:$0xff]
    %v2307 = vld [vmem:[#allocation10 + $0x50] sm:$0xff]
    %v2308 = vld [vmem:[#allocation10 + $0x58] sm:$0xff]
    %v2309 = vld [vmem:[#allocation10 + $0x60] sm:$0xff]
    %v2310 = vld [vmem:[#allocation10 + $0x68] sm:$0xff]
    %v2311 = vld [vmem:[#allocation10 + $0x70] sm:$0xff]
    %v2312 = vld [vmem:[#allocation10 + $0x78] sm:$0xff]
    %v2313 = vld [vmem:[#allocation10 + $0x80] sm:$0xff]
    %v2314 = vld [vmem:[#allocation10 + $0x88] sm:$0xff]
    %v2315 = vld [vmem:[#allocation10 + $0x90] sm:$0xff]
    %v2316 = vld [vmem:[#allocation10 + $0x98] sm:$0xff]
    %v2317 = vld [vmem:[#allocation10 + $0xa0] sm:$0xff]
    %v2318 = vld [vmem:[#allocation10 + $0xa8] sm:$0xff]
    %v2319 = vld [vmem:[#allocation10 + $0xb0] sm:$0xff]
    %v2320 = vld [vmem:[#allocation10 + $0xb8] sm:$0xff]
    %v2321 = vld [vmem:[#allocation10 + $0xc0] sm:$0xff]
    %v2322 = vld [vmem:[#allocation10 + $0xc8] sm:$0xff]
    %v2323 = vld [vmem:[#allocation10 + $0xd0] sm:$0xff]
    %v2324 = vld [vmem:[#allocation10 + $0xd8] sm:$0xff]
    %v2325 = vld [vmem:[#allocation10 + $0xe0] sm:$0xff]
    %v2326 = vld [vmem:[#allocation10 + $0xe8] sm:$0xff]
    %v2327 = vld [vmem:[#allocation10 + $0xf0] sm:$0xff]
    %v2328 = vld [vmem:[#allocation10 + $0xf8] sm:$0xff]
    %v2329 = vmul.f32 %v2234, %v2297
    %v2330 = vmul.f32 %v2236, %v2298
    %v2331 = vmul.f32 %v2238, %v2299
    %v2332 = vmul.f32 %v2240, %v2300
    %v2333 = vmul.f32 %v2242, %v2301
    %v2334 = vmul.f32 %v2244, %v2302
    %v2335 = vmul.f32 %v2246, %v2303
    %v2336 = vmul.f32 %v2248, %v2304
    %v2337 = vmul.f32 %v2250, %v2305
    %v2338 = vmul.f32 %v2252, %v2306
    %v2339 = vmul.f32 %v2254, %v2307
    %v2340 = vmul.f32 %v2256, %v2308
    %v2341 = vmul.f32 %v2258, %v2309
    %v2342 = vmul.f32 %v2260, %v2310
    %v2343 = vmul.f32 %v2262, %v2311
    %v2344 = vmul.f32 %v2264, %v2312
    %v2345 = vmul.f32 %v2266, %v2313
    %v2346 = vmul.f32 %v2268, %v2314
    %v2347 = vmul.f32 %v2270, %v2315
    %v2348 = vmul.f32 %v2272, %v2316
    %v2349 = vmul.f32 %v2274, %v2317
    %v2350 = vmul.f32 %v2276, %v2318
    %v2351 = vmul.f32 %v2278, %v2319
    %v2352 = vmul.f32 %v2280, %v2320
    %v2353 = vmul.f32 %v2282, %v2321
    %v2354 = vmul.f32 %v2284, %v2322
    %v2355 = vmul.f32 %v2286, %v2323
    %v2356 = vmul.f32 %v2288, %v2324
    %v2357 = vmul.f32 %v2290, %v2325
    %v2358 = vmul.f32 %v2292, %v2326
    %v2359 = vmul.f32 %v2294, %v2327
    %v2360 = vmul.f32 %v2296, %v2328
    %v2361 = vadd.f32 %v2011, %v2329
    %v2362 = vadd.f32 %v2017, %v2330
    %v2363 = vadd.f32 %v2023, %v2331
    %v2364 = vadd.f32 %v2029, %v2332
    %v2365 = vadd.f32 %v2035, %v2333
    %v2366 = vadd.f32 %v2041, %v2334
    %v2367 = vadd.f32 %v2047, %v2335
    %v2368 = vadd.f32 %v2053, %v2336
    %v2369 = vadd.f32 %v2059, %v2337
    %v2370 = vadd.f32 %v2065, %v2338
    %v2371 = vadd.f32 %v2071, %v2339
    %v2372 = vadd.f32 %v2077, %v2340
    %v2373 = vadd.f32 %v2083, %v2341
    %v2374 = vadd.f32 %v2089, %v2342
    %v2375 = vadd.f32 %v2095, %v2343
    %v2376 = vadd.f32 %v2101, %v2344
    %v2377 = vadd.f32 %v2107, %v2345
    %v2378 = vadd.f32 %v2113, %v2346
    %v2379 = vadd.f32 %v2119, %v2347
    %v2380 = vadd.f32 %v2125, %v2348
    %v2381 = vadd.f32 %v2131, %v2349
    %v2382 = vadd.f32 %v2137, %v2350
    %v2383 = vadd.f32 %v2143, %v2351
    %v2384 = vadd.f32 %v2149, %v2352
    %v2385 = vadd.f32 %v2155, %v2353
    %v2386 = vadd.f32 %v2161, %v2354
    %v2387 = vadd.f32 %v2167, %v2355
    %v2388 = vadd.f32 %v2173, %v2356
    %v2389 = vadd.f32 %v2179, %v2357
    %v2390 = vadd.f32 %v2185, %v2358
    %v2391 = vadd.f32 %v2191, %v2359
    %v2392 = vadd.f32 %v2197, %v2360
    %2393 = vst [vmem:[%s7] sm:$0xff] %v2361
    %2394 = vst [vmem:[%s7 + $0x18] sm:$0xff] %v2362
    %2395 = vst [vmem:[%s7 + $0x30] sm:$0xff] %v2363
    %2396 = vst [vmem:[%s7 + $0x48] sm:$0xff] %v2364
    %2397 = vst [vmem:[%s7 + $0x60] sm:$0xff] %v2365
    %2398 = vst [vmem:[%s7 + $0x78] sm:$0xff] %v2366
    %2399 = vst [vmem:[%s7 + $0x90] sm:$0xff] %v2367
    %2400 = vst [vmem:[%s7 + $0xa8] sm:$0xff] %v2368
    %2401 = vst [vmem:[%s7 + $0xc0] sm:$0xff] %v2369
    %2402 = vst [vmem:[%s7 + $0xd8] sm:$0xff] %v2370
    %2403 = vst [vmem:[%s7 + $0xf0] sm:$0xff] %v2371
    %2404 = vst [vmem:[%s7 + $0x108] sm:$0xff] %v2372
    %2405 = vst [vmem:[%s7 + $0x120] sm:$0xff] %v2373
    %2406 = vst [vmem:[%s7 + $0x138] sm:$0xff] %v2374
    %2407 = vst [vmem:[%s7 + $0x150] sm:$0xff] %v2375
    %2408 = vst [vmem:[%s7 + $0x168] sm:$0xff] %v2376
    %2409 = vst [vmem:[%s7 + $0x180] sm:$0xff] %v2377
    %2410 = vst [vmem:[%s7 + $0x198] sm:$0xff] %v2378
    %2411 = vst [vmem:[%s7 + $0x1b0] sm:$0xff] %v2379
    %2412 = vst [vmem:[%s7 + $0x1c8] sm:$0xff] %v2380
    %2413 = vst [vmem:[%s7 + $0x1e0] sm:$0xff] %v2381
    %2414 = vst [vmem:[%s7 + $0x1f8] sm:$0xff] %v2382
    %2415 = vst [vmem:[%s7 + $0x210] sm:$0xff] %v2383
    %2416 = vst [vmem:[%s7 + $0x228] sm:$0xff] %v2384
    %2417 = vst [vmem:[%s7 + $0x240] sm:$0xff] %v2385
    %2418 = vst [vmem:[%s7 + $0x258] sm:$0xff] %v2386
    %2419 = vst [vmem:[%s7 + $0x270] sm:$0xff] %v2387
    %2420 = vst [vmem:[%s7 + $0x288] sm:$0xff] %v2388
    %2421 = vst [vmem:[%s7 + $0x2a0] sm:$0xff] %v2389
    %2422 = vst [vmem:[%s7 + $0x2b8] sm:$0xff] %v2390
    %2423 = vst [vmem:[%s7 + $0x2d0] sm:$0xff] %v2391
    %2424 = vst [vmem:[%s7 + $0x2e8] sm:$0xff] %v2392
    %2425 = vst [vmem:[%s7 + $0x8] sm:$0xff] %v2011
    %2426 = vst [vmem:[%s7 + $0x20] sm:$0xff] %v2017
    %2427 = vst [vmem:[%s7 + $0x38] sm:$0xff] %v2023
    %2428 = vst [vmem:[%s7 + $0x50] sm:$0xff] %v2029
    %2429 = vst [vmem:[%s7 + $0x68] sm:$0xff] %v2035
    %2430 = vst [vmem:[%s7 + $0x80] sm:$0xff] %v2041
    %2431 = vst [vmem:[%s7 + $0x98] sm:$0xff] %v2047
    %2432 = vst [vmem:[%s7 + $0xb0] sm:$0xff] %v2053
    %2433 = vst [vmem:[%s7 + $0xc8] sm:$0xff] %v2059
    %2434 = vst [vmem:[%s7 + $0xe0] sm:$0xff] %v2065
    %2435 = vst [vmem:[%s7 + $0xf8] sm:$0xff] %v2071
    %2436 = vst [vmem:[%s7 + $0x110] sm:$0xff] %v2077
    %2437 = vst [vmem:[%s7 + $0x128] sm:$0xff] %v2083
    %2438 = vst [vmem:[%s7 + $0x140] sm:$0xff] %v2089
    %2439 = vst [vmem:[%s7 + $0x158] sm:$0xff] %v2095
    %2440 = vst [vmem:[%s7 + $0x170] sm:$0xff] %v2101
    %2441 = vst [vmem:[%s7 + $0x188] sm:$0xff] %v2107
    %2442 = vst [vmem:[%s7 + $0x1a0] sm:$0xff] %v2113
    %2443 = vst [vmem:[%s7 + $0x1b8] sm:$0xff] %v2119
    %2444 = vst [vmem:[%s7 + $0x1d0] sm:$0xff] %v2125
    %2445 = vst [vmem:[%s7 + $0x1e8] sm:$0xff] %v2131
    %2446 = vst [vmem:[%s7 + $0x200] sm:$0xff] %v2137
    %2447 = vst [vmem:[%s7 + $0x218] sm:$0xff] %v2143
    %2448 = vst [vmem:[%s7 + $0x230] sm:$0xff] %v2149
    %2449 = vst [vmem:[%s7 + $0x248] sm:$0xff] %v2155
    %2450 = vst [vmem:[%s7 + $0x260] sm:$0xff] %v2161
    %2451 = vst [vmem:[%s7 + $0x278] sm:$0xff] %v2167
    %2452 = vst [vmem:[%s7 + $0x290] sm:$0xff] %v2173
    %2453 = vst [vmem:[%s7 + $0x2a8] sm:$0xff] %v2179
    %2454 = vst [vmem:[%s7 + $0x2c0] sm:$0xff] %v2185
    %2455 = vst [vmem:[%s7 + $0x2d8] sm:$0xff] %v2191
    %2456 = vst [vmem:[%s7 + $0x2f0] sm:$0xff] %v2197
    %2457 = vst [vmem:[%s7 + $0x10] sm:$0xff] %v2013
    %2458 = vst [vmem:[%s7 + $0x28] sm:$0xff] %v2019
    %2459 = vst [vmem:[%s7 + $0x40] sm:$0xff] %v2025
    %2460 = vst [vmem:[%s7 + $0x58] sm:$0xff] %v2031
    %2461 = vst [vmem:[%s7 + $0x70] sm:$0xff] %v2037
    %2462 = vst [vmem:[%s7 + $0x88] sm:$0xff] %v2043
    %2463 = vst [vmem:[%s7 + $0xa0] sm:$0xff] %v2049
    %2464 = vst [vmem:[%s7 + $0xb8] sm:$0xff] %v2055
    %2465 = vst [vmem:[%s7 + $0xd0] sm:$0xff] %v2061
    %2466 = vst [vmem:[%s7 + $0xe8] sm:$0xff] %v2067
    %2467 = vst [vmem:[%s7 + $0x100] sm:$0xff] %v2073
    %2468 = vst [vmem:[%s7 + $0x118] sm:$0xff] %v2079
    %2469 = vst [vmem:[%s7 + $0x130] sm:$0xff] %v2085
    %2470 = vst [vmem:[%s7 + $0x148] sm:$0xff] %v2091
    %2471 = vst [vmem:[%s7 + $0x160] sm:$0xff] %v2097
    %2472 = vst [vmem:[%s7 + $0x178] sm:$0xff] %v2103
    %2473 = vst [vmem:[%s7 + $0x190] sm:$0xff] %v2109
    %2474 = vst [vmem:[%s7 + $0x1a8] sm:$0xff] %v2115
    %2475 = vst [vmem:[%s7 + $0x1c0] sm:$0xff] %v2121
    %2476 = vst [vmem:[%s7 + $0x1d8] sm:$0xff] %v2127
    %2477 = vst [vmem:[%s7 + $0x1f0] sm:$0xff] %v2133
    %2478 = vst [vmem:[%s7 + $0x208] sm:$0xff] %v2139
    %2479 = vst [vmem:[%s7 + $0x220] sm:$0xff] %v2145
    %2480 = vst [vmem:[%s7 + $0x238] sm:$0xff] %v2151
    %2481 = vst [vmem:[%s7 + $0x250] sm:$0xff] %v2157
    %2482 = vst [vmem:[%s7 + $0x268] sm:$0xff] %v2163
    %2483 = vst [vmem:[%s7 + $0x280] sm:$0xff] %v2169
    %2484 = vst [vmem:[%s7 + $0x298] sm:$0xff] %v2175
    %2485 = vst [vmem:[%s7 + $0x2b0] sm:$0xff] %v2181
    %2486 = vst [vmem:[%s7 + $0x2c8] sm:$0xff] %v2187
    %2487 = vst [vmem:[%s7 + $0x2e0] sm:$0xff] %v2193
    %2488 = vst [vmem:[%s7 + $0x2f8] sm:$0xff] %v2199
    // Predicated region
    $region54: #{encoder_forward.1} parent=1 // pred_check
      _
    $region55: #{encoder_forward.1} parent=1 // pred_check_branch
      %2490 = sbr.rel (0) target = $region57
    $region56: #{encoder_forward.1} parent=1 // pred_region
      _
    $region57: #{encoder_forward.1} parent=1 // pred_fallthru
      _
    // Predicated region
    $region58: #{encoder_forward.1} parent=1 // pred_check
      _
    $region59: #{encoder_forward.1} parent=1 // pred_check_branch
      %2492 = sbr.rel (0) target = $region61
    $region60: #{encoder_forward.1} parent=1 // pred_region
      _
    $region61: #{encoder_forward.1} parent=1 // pred_fallthru
      _
    %2493 = vsyncpa [#allocation3], 1
    %2494 = vsyncpa [#allocation5], 1
    %2495 = vsyncpa [#allocation8], 1
    %2496 = vsyncpa [#allocation11], 1

</llo_original>
